<compile_context>
chip_gen: v5e
topology: v5e:2x2
jax: 0.10.0
libtpu: 0.0.40
codegen_flags: <defaults>
</compile_context>

<pallas_src>
import functools

import jax
import jax.numpy as jnp
from jax.experimental import pallas as pl
from jax.experimental.pallas import tpu as pltpu


# ----------------------------------------------------------------------------
# Kernel body: 3 MXU passes, f32 accumulation, epilogue dtype = bias dtype.
# ----------------------------------------------------------------------------
def _mlp_kernel(x_ref, w1_ref, b1_ref, w23_ref, b23_ref, w4_ref, b4_ref, o_ref):
    # In-kernel cast of x to the compute dtype (no wrapper-side HBM pass).
    x = x_ref[...].astype(w1_ref.dtype)

    acc = jnp.dot(x, w1_ref[...], preferred_element_type=jnp.float32)
    # ReLU (Dropout(0.3) is identity in eval mode). Epilogue dtype == bias dtype.
    h = jnp.maximum(acc.astype(b1_ref.dtype) + b1_ref[...], 0.0)

    acc = jnp.dot(h.astype(w23_ref.dtype), w23_ref[...],
                  preferred_element_type=jnp.float32)
    h = jnp.maximum(acc.astype(b23_ref.dtype) + b23_ref[...], 0.0)

    acc = jnp.dot(h.astype(w4_ref.dtype), w4_ref[...],
                  preferred_element_type=jnp.float32)
    o_ref[...] = (acc + b4_ref[...].astype(jnp.float32)).astype(o_ref.dtype)


# ----------------------------------------------------------------------------
# Hardware helpers
# ----------------------------------------------------------------------------
def _device_kind():
    try:
        return jax.devices()[0].device_kind.lower()
    except Exception:
        return ""


def _is_v5(kind):
    # v5e / v5 lite: no bf16 VPU -> keep f32 epilogues; MXU M tile = 128.
    return "v5" in kind


def _vmem_capacity_bytes(kind):
    try:
        cap = getattr(pltpu.get_tpu_info(), "vmem_capacity_bytes", None)
        if cap:
            return int(cap)
    except Exception:
        pass
    if "v5" in kind or "v6" in kind:
        return 128 << 20
    return 64 << 20  # conservative default (v7x per-TensorCore VMEM)


def _cdiv(a, b):
    return -(-a // b)


def _round_up(a, m):
    return _cdiv(a, m) * m


def _choose_tile_b(batch, tile_b, align):
    """Batch-tile size: MXU-aligned, grid >= 2 (and preferably even) for v7x."""
    align = max(8, int(align))
    tb = min(int(tile_b), batch)
    if tb >= batch:
        # Whole batch fits one tile.  Still split into two aligned tiles when
        # the batch is big enough, so v7x's two TensorCores both get work.
        if batch >= 2 * align:
            return _round_up(_cdiv(batch, 2), align)
        return batch  # tiny batch: single full-extent block
    # Streaming case: align the tile to the MXU row tile (>= sublane multiple).
    a = align if tb >= align else 8
    tb = max(a, (tb // a) * a)
    n = _cdiv(batch, tb)
    if n > 1 and n % 2 == 1:
        # Prefer an even grid so v7x's two cores stay balanced.
        tb = max(a, _round_up(_cdiv(batch, n + 1), a))
    return tb


# ----------------------------------------------------------------------------
# One-time parameter preparation (hoisted out of the per-call hot path).
# ----------------------------------------------------------------------------
def prepare_params(params, *, compute_dtype=jnp.bfloat16, epilogue_dtype=None):
    """Fold the two back-to-back Linears (w2, w3) in f32/HIGHEST precision and
    cast weights/biases to their kernel dtypes.  Call once at load time."""
    if epilogue_dtype is None:
        epilogue_dtype = jnp.float32 if _is_v5(_device_kind()) else jnp.bfloat16
    hi = jax.lax.Precision.HIGHEST
    w23 = jnp.dot(params["w2"], params["w3"], precision=hi)
    b23 = jnp.dot(params["b2"], params["w3"], precision=hi) + params["b3"]
    return {
        "w1": params["w1"].astype(compute_dtype),
        "b1": params["b1"].astype(epilogue_dtype),
        "w23": w23.astype(compute_dtype),
        "b23": b23.astype(epilogue_dtype),
        "w4": params["w4"].astype(compute_dtype),
        "b4": params["b4"].astype(jnp.float32),
    }


# ----------------------------------------------------------------------------
# Wrapper
# ----------------------------------------------------------------------------
def dlrm_style_predictor(x, params, *, tile_b=2048, compute_dtype=jnp.bfloat16,
                         epilogue_dtype=None, out_dtype=jnp.float32,
                         batch_align=None):
    """x: [B, input_dim].  params: prepare_params() output (or raw w1..w4/b1..b4,
    folded on the fly).  Returns [B, output_dim] in out_dtype."""
    if "w23" not in params:  # allow raw params, but prefer prepare_params() offline
        params = prepare_params(params, compute_dtype=compute_dtype,
                                epilogue_dtype=epilogue_dtype)
    w1, b1 = params["w1"], params["b1"]
    w23, b23 = params["w23"], params["b23"]
    w4, b4 = params["w4"], params["b4"]

    batch, input_dim = x.shape
    h2 = w1.shape[1]        # 2 * hidden
    hh = w23.shape[1]       # hidden // 2
    out_dim = w4.shape[1]

    kind = _device_kind()
    align = batch_align if batch_align is not None else (128 if _is_v5(kind) else 256)
    tb = _choose_tile_b(batch, tile_b, align)
    grid = (pl.cdiv(batch, tb),)  # non-divisible grid: Pallas masks the ragged tail

    # ---- VMEM budget (per generation), including the double-buffered x/out
    # tiles, resident weights (counted x2 in case single-buffering is ignored),
    # and the f32 accumulators / epilogue / next-dot-input temporaries. ----
    x_b = x.dtype.itemsize
    o_b = jnp.dtype(out_dtype).itemsize
    cd_b = w1.dtype.itemsize
    ep_b = b1.dtype.itemsize
    weight_bytes = sum(int(a.size) * a.dtype.itemsize
                       for a in (w1, b1, w23, b23, w4, b4))
    step_bytes = (2 * tb * input_dim * x_b
                  + tb * input_dim * cd_b
                  + 2 * tb * out_dim * o_b
                  + tb * (h2 + hh) * (4 + ep_b + cd_b)
                  + 2 * weight_bytes)
    vmem_cap = _vmem_capacity_bytes(kind)
    vmem_limit = int(min(max(int(step_bytes * 1.25), 16 << 20),
                         int(vmem_cap * 0.75)))

    # Advisory cost hint so XLA overlaps neighbors with this mem-bound call.
    flops = 2 * batch * (input_dim * h2 + h2 * hh + hh * out_dim)
    bytes_accessed = (batch * input_dim * x_b + batch * out_dim * o_b
                      + weight_bytes)
    cost = pl.CostEstimate(flops=int(flops), transcendentals=0,
                           bytes_accessed=int(bytes_accessed))

    def run(single_buffer_weights):
        pm = pl.Buffered(1) if single_buffer_weights else None

        def resident(a):
            # Constant index_map: weights/biases stay in VMEM across the grid.
            return pl.BlockSpec(a.shape, lambda i: (0, 0), pipeline_mode=pm)

        in_specs = [
            pl.BlockSpec((tb, input_dim), lambda i: (i, 0)),  # x: streamed tiles
            resident(w1), resident(b1),
            resident(w23), resident(b23),
            resident(w4), resident(b4),
        ]
        out_specs = pl.BlockSpec((tb, out_dim), lambda i: (i, 0))

        return pl.pallas_call(
            _mlp_kernel,
            out_shape=jax.ShapeDtypeStruct((batch, out_dim), out_dtype),
            grid_spec=pltpu.PrefetchScalarGridSpec(
                num_scalar_prefetch=0,
                grid=grid,
                in_specs=in_specs,
                out_specs=out_specs,
            ),
            compiler_params=pltpu.CompilerParams(
                dimension_semantics=("parallel",),   # megacore sharding on v7x
                vmem_limit_bytes=vmem_limit,
            ),
            cost_estimate=cost,
        )(x, w1, b1, w23, b23, w4, b4)

    try:
        return run(True)
    except Exception:
        # pipeline_mode=pl.Buffered(1) not supported by this jax build: fall back
        # to default double-buffered resident weights (correctness unaffected).
        return run(False)


# ----------------------------------------------------------------------------
# Init + references
# ----------------------------------------------------------------------------
def init_params(key, input_dim, hidden_dim, output_dim):
    """PyTorch-Linear-like U(-1/sqrt(fan_in), 1/sqrt(fan_in)) init.
    Weights stored transposed: [in_features, out_features]."""
    dims = [
        (input_dim, hidden_dim * 2),    # upstream_mlp[0]
        (hidden_dim * 2, hidden_dim),   # upstream_mlp[3]
        (hidden_dim, hidden_dim // 2),  # downstream_mlp[0]
        (hidden_dim // 2, output_dim),  # downstream_mlp[3]
    ]
    params = {}
    keys = jax.random.split(key, 2 * len(dims))
    for i, (fan_in, fan_out) in enumerate(dims):
        bound = 1.0 / jnp.sqrt(jnp.float32(fan_in))
        params[f"w{i+1}"] = jax.random.uniform(
            keys[2 * i], (fan_in, fan_out), jnp.float32, -bound, bound)
        params[f"b{i+1}"] = jax.random.uniform(
            keys[2 * i + 1], (1, fan_out), jnp.float32, -bound, bound)
    return params


def _reference_f32(x, p):
    # Exact eval-mode module math (4 unfolded linears, all f32).
    h = jnp.maximum(x @ p["w1"] + p["b1"], 0.0)
    h = h @ p["w2"] + p["b2"]
    h = jnp.maximum(h @ p["w3"] + p["b3"], 0.0)
    return h @ p["w4"] + p["b4"]


def _reference_compute(x, pp):
    # Mirrors the kernel's folded / mixed-precision math on prepared params.
    xc = x.astype(pp["w1"].dtype)
    acc = jnp.dot(xc, pp["w1"], preferred_element_type=jnp.float32)
    h = jnp.maximum(acc.astype(pp["b1"].dtype) + pp["b1"], 0.0)
    acc = jnp.dot(h.astype(pp["w23"].dtype), pp["w23"],
                  preferred_element_type=jnp.float32)
    h = jnp.maximum(acc.astype(pp["b23"].dtype) + pp["b23"], 0.0)
    acc = jnp.dot(h.astype(pp["w4"].dtype), pp["w4"],
                  preferred_element_type=jnp.float32)
    return acc + pp["b4"].astype(jnp.float32)


if __name__ == "__main__":
    # Small shapes; batch=50 with tile_b=16 / batch_align=8 exercises the
    # streaming batch grid plus the ragged (partial) final block.
    batch, input_dim, hidden_dim, output_dim = 50, 32, 32, 16

    key = jax.random.PRNGKey(0)
    k_x, k_p = jax.random.split(key)
    x = jax.random.normal(k_x, (batch, input_dim), jnp.float32)
    params = init_params(k_p, input_dim, hidden_dim, output_dim)

    prepared = prepare_params(params)  # one-time fold + casts (out of hot path)
    out = dlrm_style_predictor(x, prepared, tile_b=16, batch_align=8)
    out = jax.block_until_ready(out)
    assert out.shape == (batch, output_dim)

    # Tight check vs a reference mirroring the kernel's exact math path.
    ref_c = _reference_compute(x, prepared)
    assert jnp.allclose(out, ref_c, atol=2e-2, rtol=2e-2), \
        "mismatch vs compute-path reference"

    # Loose check vs exact f32 eval-mode module semantics (bf16 in kernel).
    ref_f = _reference_f32(x, params)
    assert jnp.allclose(out, ref_f, atol=1e-1, rtol=1e-1), \
        "mismatch vs f32 module reference"

    print("KERNEL_OK")
</pallas_src>

<mosaic_0001>
module attributes {stable_mosaic.version = 11 : i64} {
  func.func @_mlp_kernel(%arg0: i32, %arg1: memref<16x32xf32, #tpu.memory_space<vmem>>, %arg2: memref<32x64xbf16, #tpu.memory_space<vmem>>, %arg3: memref<1x64xbf16, #tpu.memory_space<vmem>>, %arg4: memref<64x16xbf16, #tpu.memory_space<vmem>>, %arg5: memref<1x16xbf16, #tpu.memory_space<vmem>>, %arg6: memref<16x16xbf16, #tpu.memory_space<vmem>>, %arg7: memref<1x16xf32, #tpu.memory_space<vmem>>, %arg8: memref<16x16xf32, #tpu.memory_space<vmem>>) attributes {dimension_semantics = [#tpu.dimension_semantics<parallel>], iteration_bounds = array<i64: 4>, scalar_prefetch = 0 : i64, scratch_operands = 0 : i64, tpu.core_type = #tpu.core_type<tc>, window_params = [{transform_indices = @transform_0, window_bounds = array<i64: 16, 32>}, {pipeline_mode = #tpu.pipeline_mode<synchronous>, transform_indices = @transform_1, window_bounds = array<i64: 32, 64>}, {pipeline_mode = #tpu.pipeline_mode<synchronous>, transform_indices = @transform_2, window_bounds = array<i64: 1, 64>}, {pipeline_mode = #tpu.pipeline_mode<synchronous>, transform_indices = @transform_3, window_bounds = array<i64: 64, 16>}, {pipeline_mode = #tpu.pipeline_mode<synchronous>, transform_indices = @transform_4, window_bounds = array<i64: 1, 16>}, {pipeline_mode = #tpu.pipeline_mode<synchronous>, transform_indices = @transform_5, window_bounds = array<i64: 16, 16>}, {pipeline_mode = #tpu.pipeline_mode<synchronous>, transform_indices = @transform_6, window_bounds = array<i64: 1, 16>}, {transform_indices = @transform_7, window_bounds = array<i64: 16, 16>}]} {
    %c0 = arith.constant 0 : index
    %c0_0 = arith.constant 0 : index
    %0 = vector.load %arg1[%c0, %c0_0] : memref<16x32xf32, #tpu.memory_space<vmem>>, vector<16x32xf32>
    %1 = arith.truncf %0 : vector<16x32xf32> to vector<16x32xbf16>
    %c0_1 = arith.constant 0 : index
    %c0_2 = arith.constant 0 : index
    %2 = vector.load %arg2[%c0_1, %c0_2] : memref<32x64xbf16, #tpu.memory_space<vmem>>, vector<32x64xbf16>
    %cst = arith.constant dense<0.000000e+00> : vector<16x64xf32>
    %3 = tpu.matmul %1, %2, %cst {dimension_numbers = #tpu.dot_dimension_numbers<[1], [0], [0], [1], [0, 0, 1, 1], [], []>} : vector<16x32xbf16>, vector<32x64xbf16>, vector<16x64xf32> -> vector<16x64xf32>
    %4 = arith.truncf %3 : vector<16x64xf32> to vector<16x64xbf16>
    %c0_3 = arith.constant 0 : index
    %c0_4 = arith.constant 0 : index
    %5 = vector.load %arg3[%c0_3, %c0_4] : memref<1x64xbf16, #tpu.memory_space<vmem>>, vector<1x64xbf16>
    %6 = vector.broadcast %5 : vector<1x64xbf16> to vector<16x64xbf16>
    %7 = arith.addf %4, %6 : vector<16x64xbf16>
    %cst_5 = arith.constant 0.000000e+00 : bf16
    %8 = vector.broadcast %cst_5 : bf16 to vector<16x64xbf16>
    %9 = arith.maximumf %7, %8 : vector<16x64xbf16>
    %c0_6 = arith.constant 0 : index
    %c0_7 = arith.constant 0 : index
    %10 = vector.load %arg4[%c0_6, %c0_7] : memref<64x16xbf16, #tpu.memory_space<vmem>>, vector<64x16xbf16>
    %cst_8 = arith.constant dense<0.000000e+00> : vector<16x16xf32>
    %11 = tpu.matmul %9, %10, %cst_8 {dimension_numbers = #tpu.dot_dimension_numbers<[1], [0], [0], [1], [0, 0, 1, 1], [], []>} : vector<16x64xbf16>, vector<64x16xbf16>, vector<16x16xf32> -> vector<16x16xf32>
    %12 = arith.truncf %11 : vector<16x16xf32> to vector<16x16xbf16>
    %c0_9 = arith.constant 0 : index
    %c0_10 = arith.constant 0 : index
    %13 = vector.load %arg5[%c0_9, %c0_10] : memref<1x16xbf16, #tpu.memory_space<vmem>>, vector<1x16xbf16>
    %14 = vector.broadcast %13 : vector<1x16xbf16> to vector<16x16xbf16>
    %15 = arith.addf %12, %14 : vector<16x16xbf16>
    %cst_11 = arith.constant 0.000000e+00 : bf16
    %16 = vector.broadcast %cst_11 : bf16 to vector<16x16xbf16>
    %17 = arith.maximumf %15, %16 : vector<16x16xbf16>
    %c0_12 = arith.constant 0 : index
    %c0_13 = arith.constant 0 : index
    %18 = vector.load %arg6[%c0_12, %c0_13] : memref<16x16xbf16, #tpu.memory_space<vmem>>, vector<16x16xbf16>
    %cst_14 = arith.constant dense<0.000000e+00> : vector<16x16xf32>
    %19 = tpu.matmul %17, %18, %cst_14 {dimension_numbers = #tpu.dot_dimension_numbers<[1], [0], [0], [1], [0, 0, 1, 1], [], []>} : vector<16x16xbf16>, vector<16x16xbf16>, vector<16x16xf32> -> vector<16x16xf32>
    %c0_15 = arith.constant 0 : index
    %c0_16 = arith.constant 0 : index
    %20 = vector.load %arg7[%c0_15, %c0_16] : memref<1x16xf32, #tpu.memory_space<vmem>>, vector<1x16xf32>
    %21 = vector.broadcast %20 : vector<1x16xf32> to vector<16x16xf32>
    %22 = arith.addf %19, %21 : vector<16x16xf32>
    %c0_17 = arith.constant 0 : index
    %c0_18 = arith.constant 0 : index
    %23 = vector.load %arg8[%c0_17, %c0_18] : memref<16x16xf32, #tpu.memory_space<vmem>>, vector<16x16xf32>
    tpu.vector_store %arg8[%c0_17, %c0_18], %22 {strides = array<i32>} : memref<16x16xf32, #tpu.memory_space<vmem>>, vector<16x16xf32>,
    return
  }
  func.func @transform_0(%arg0: i32) -> (i32, i32) {
    %c0_i32 = arith.constant 0 : i32
    %c0_i32_0 = arith.constant 0 : i32
    return %arg0, %c0_i32 : i32, i32
  }
  func.func @transform_1(%arg0: i32) -> (i32, i32) {
    %c0_i32 = arith.constant 0 : i32
    %c0_i32_0 = arith.constant 0 : i32
    %c0_i32_1 = arith.constant 0 : i32
    return %c0_i32, %c0_i32_0 : i32, i32
  }
  func.func @transform_2(%arg0: i32) -> (i32, i32) {
    %c0_i32 = arith.constant 0 : i32
    %c0_i32_0 = arith.constant 0 : i32
    %c0_i32_1 = arith.constant 0 : i32
    return %c0_i32, %c0_i32_0 : i32, i32
  }
  func.func @transform_3(%arg0: i32) -> (i32, i32) {
    %c0_i32 = arith.constant 0 : i32
    %c0_i32_0 = arith.constant 0 : i32
    %c0_i32_1 = arith.constant 0 : i32
    return %c0_i32, %c0_i32_0 : i32, i32
  }
  func.func @transform_4(%arg0: i32) -> (i32, i32) {
    %c0_i32 = arith.constant 0 : i32
    %c0_i32_0 = arith.constant 0 : i32
    %c0_i32_1 = arith.constant 0 : i32
    return %c0_i32, %c0_i32_0 : i32, i32
  }
  func.func @transform_5(%arg0: i32) -> (i32, i32) {
    %c0_i32 = arith.constant 0 : i32
    %c0_i32_0 = arith.constant 0 : i32
    %c0_i32_1 = arith.constant 0 : i32
    return %c0_i32, %c0_i32_0 : i32, i32
  }
  func.func @transform_6(%arg0: i32) -> (i32, i32) {
    %c0_i32 = arith.constant 0 : i32
    %c0_i32_0 = arith.constant 0 : i32
    %c0_i32_1 = arith.constant 0 : i32
    return %c0_i32, %c0_i32_0 : i32, i32
  }
  func.func @transform_7(%arg0: i32) -> (i32, i32) {
    %c0_i32 = arith.constant 0 : i32
    %c0_i32_0 = arith.constant 0 : i32
    return %arg0, %c0_i32 : i32, i32
  }
}

module attributes {stable_mosaic.version = 11 : i64} {
  func.func @_mlp_kernel(%arg0: i32, %arg1: memref<16x32xf32, #tpu.memory_space<vmem>>, %arg2: memref<32x64xbf16, #tpu.memory_space<vmem>>, %arg3: memref<1x64xbf16, #tpu.memory_space<vmem>>, %arg4: memref<64x16xbf16, #tpu.memory_space<vmem>>, %arg5: memref<1x16xbf16, #tpu.memory_space<vmem>>, %arg6: memref<16x16xbf16, #tpu.memory_space<vmem>>, %arg7: memref<1x16xf32, #tpu.memory_space<vmem>>, %arg8: memref<16x16xf32, #tpu.memory_space<vmem>>) attributes {dimension_semantics = [#tpu.dimension_semantics<parallel>], iteration_bounds = array<i64: 4>, scalar_prefetch = 0 : i64, scratch_operands = 0 : i64, tpu.core_type = #tpu.core_type<tc>, window_params = [{transform_indices = @transform_0, window_bounds = array<i64: 16, 32>}, {pipeline_mode = #tpu.pipeline_mode<synchronous>, transform_indices = @transform_1, window_bounds = array<i64: 32, 64>}, {pipeline_mode = #tpu.pipeline_mode<synchronous>, transform_indices = @transform_2, window_bounds = array<i64: 1, 64>}, {pipeline_mode = #tpu.pipeline_mode<synchronous>, transform_indices = @transform_3, window_bounds = array<i64: 64, 16>}, {pipeline_mode = #tpu.pipeline_mode<synchronous>, transform_indices = @transform_4, window_bounds = array<i64: 1, 16>}, {pipeline_mode = #tpu.pipeline_mode<synchronous>, transform_indices = @transform_5, window_bounds = array<i64: 16, 16>}, {pipeline_mode = #tpu.pipeline_mode<synchronous>, transform_indices = @transform_6, window_bounds = array<i64: 1, 16>}, {transform_indices = @transform_7, window_bounds = array<i64: 16, 16>}]} {
    %c0 = arith.constant 0 : index
    %c0_0 = arith.constant 0 : index
    %0 = vector.load %arg1[%c0, %c0_0] : memref<16x32xf32, #tpu.memory_space<vmem>>, vector<16x32xf32>
    %1 = arith.truncf %0 : vector<16x32xf32> to vector<16x32xbf16>
    %c0_1 = arith.constant 0 : index
    %c0_2 = arith.constant 0 : index
    %2 = vector.load %arg2[%c0_1, %c0_2] : memref<32x64xbf16, #tpu.memory_space<vmem>>, vector<32x64xbf16>
    %cst = arith.constant dense<0.000000e+00> : vector<16x64xf32>
    %3 = tpu.matmul %1, %2, %cst {dimension_numbers = #tpu.dot_dimension_numbers<[1], [0], [0], [1], [0, 0, 1, 1], [], []>} : vector<16x32xbf16>, vector<32x64xbf16>, vector<16x64xf32> -> vector<16x64xf32>
    %4 = arith.truncf %3 : vector<16x64xf32> to vector<16x64xbf16>
    %c0_3 = arith.constant 0 : index
    %c0_4 = arith.constant 0 : index
    %5 = vector.load %arg3[%c0_3, %c0_4] : memref<1x64xbf16, #tpu.memory_space<vmem>>, vector<1x64xbf16>
    %6 = vector.broadcast %5 : vector<1x64xbf16> to vector<16x64xbf16>
    %7 = arith.addf %4, %6 : vector<16x64xbf16>
    %cst_5 = arith.constant 0.000000e+00 : bf16
    %8 = vector.broadcast %cst_5 : bf16 to vector<16x64xbf16>
    %9 = arith.maximumf %7, %8 : vector<16x64xbf16>
    %c0_6 = arith.constant 0 : index
    %c0_7 = arith.constant 0 : index
    %10 = vector.load %arg4[%c0_6, %c0_7] : memref<64x16xbf16, #tpu.memory_space<vmem>>, vector<64x16xbf16>
    %cst_8 = arith.constant dense<0.000000e+00> : vector<16x16xf32>
    %11 = tpu.matmul %9, %10, %cst_8 {dimension_numbers = #tpu.dot_dimension_numbers<[1], [0], [0], [1], [0, 0, 1, 1], [], []>} : vector<16x64xbf16>, vector<64x16xbf16>, vector<16x16xf32> -> vector<16x16xf32>
    %12 = arith.truncf %11 : vector<16x16xf32> to vector<16x16xbf16>
    %c0_9 = arith.constant 0 : index
    %c0_10 = arith.constant 0 : index
    %13 = vector.load %arg5[%c0_9, %c0_10] : memref<1x16xbf16, #tpu.memory_space<vmem>>, vector<1x16xbf16>
    %14 = vector.broadcast %13 : vector<1x16xbf16> to vector<16x16xbf16>
    %15 = arith.addf %12, %14 : vector<16x16xbf16>
    %cst_11 = arith.constant 0.000000e+00 : bf16
    %16 = vector.broadcast %cst_11 : bf16 to vector<16x16xbf16>
    %17 = arith.maximumf %15, %16 : vector<16x16xbf16>
    %c0_12 = arith.constant 0 : index
    %c0_13 = arith.constant 0 : index
    %18 = vector.load %arg6[%c0_12, %c0_13] : memref<16x16xbf16, #tpu.memory_space<vmem>>, vector<16x16xbf16>
    %cst_14 = arith.constant dense<0.000000e+00> : vector<16x16xf32>
    %19 = tpu.matmul %17, %18, %cst_14 {dimension_numbers = #tpu.dot_dimension_numbers<[1], [0], [0], [1], [0, 0, 1, 1], [], []>} : vector<16x16xbf16>, vector<16x16xbf16>, vector<16x16xf32> -> vector<16x16xf32>
    %c0_15 = arith.constant 0 : index
    %c0_16 = arith.constant 0 : index
    %20 = vector.load %arg7[%c0_15, %c0_16] : memref<1x16xf32, #tpu.memory_space<vmem>>, vector<1x16xf32>
    %21 = vector.broadcast %20 : vector<1x16xf32> to vector<16x16xf32>
    %22 = arith.addf %19, %21 : vector<16x16xf32>
    %c0_17 = arith.constant 0 : index
    %c0_18 = arith.constant 0 : index
    %23 = vector.load %arg8[%c0_17, %c0_18] : memref<16x16xf32, #tpu.memory_space<vmem>>, vector<16x16xf32>
    tpu.vector_store %arg8[%c0_17, %c0_18], %22 {strides = array<i32>} : memref<16x16xf32, #tpu.memory_space<vmem>>, vector<16x16xf32>,
    return
  }
  func.func @transform_0(%arg0: i32) -> (i32, i32) {
    %c0_i32 = arith.constant 0 : i32
    %c0_i32_0 = arith.constant 0 : i32
    return %arg0, %c0_i32 : i32, i32
  }
  func.func @transform_1(%arg0: i32) -> (i32, i32) {
    %c0_i32 = arith.constant 0 : i32
    %c0_i32_0 = arith.constant 0 : i32
    %c0_i32_1 = arith.constant 0 : i32
    return %c0_i32, %c0_i32_0 : i32, i32
  }
  func.func @transform_2(%arg0: i32) -> (i32, i32) {
    %c0_i32 = arith.constant 0 : i32
    %c0_i32_0 = arith.constant 0 : i32
    %c0_i32_1 = arith.constant 0 : i32
    return %c0_i32, %c0_i32_0 : i32, i32
  }
  func.func @transform_3(%arg0: i32) -> (i32, i32) {
    %c0_i32 = arith.constant 0 : i32
    %c0_i32_0 = arith.constant 0 : i32
    %c0_i32_1 = arith.constant 0 : i32
    return %c0_i32, %c0_i32_0 : i32, i32
  }
  func.func @transform_4(%arg0: i32) -> (i32, i32) {
    %c0_i32 = arith.constant 0 : i32
    %c0_i32_0 = arith.constant 0 : i32
    %c0_i32_1 = arith.constant 0 : i32
    return %c0_i32, %c0_i32_0 : i32, i32
  }
  func.func @transform_5(%arg0: i32) -> (i32, i32) {
    %c0_i32 = arith.constant 0 : i32
    %c0_i32_0 = arith.constant 0 : i32
    %c0_i32_1 = arith.constant 0 : i32
    return %c0_i32, %c0_i32_0 : i32, i32
  }
  func.func @transform_6(%arg0: i32) -> (i32, i32) {
    %c0_i32 = arith.constant 0 : i32
    %c0_i32_0 = arith.constant 0 : i32
    %c0_i32_1 = arith.constant 0 : i32
    return %c0_i32, %c0_i32_0 : i32, i32
  }
  func.func @transform_7(%arg0: i32) -> (i32, i32) {
    %c0_i32 = arith.constant 0 : i32
    %c0_i32_0 = arith.constant 0 : i32
    return %arg0, %c0_i32 : i32, i32
  }
}

</mosaic_0001>

<llo_original>
// kernel: tpu_custom_call.1
$region0: #{tpu_custom_call.1}
  #allocation0 [shape = 'u32[]', space=smem, size = 0x4, offset = 0x4, fixed_abs, tag = 'smem constant byte address 0x4 - core index']
  #allocation1 [shape = 'u32[72,128]{1,0:T(1,128)}', space=vmem, size = 0x9000, scoped, tag = 'internal scratch']
  %s0 = inlined_call_operand.vmem [shape: f32[50,32], index: 0, kind: input, shape index: {}]
  %s1 = inlined_call_operand.vmem [shape: bf16[32,64], index: 1, kind: input, shape index: {}]
  %s2 = inlined_call_operand.vmem [shape: bf16[1,64], index: 2, kind: input, shape index: {}]
  %s3 = inlined_call_operand.vmem [shape: bf16[64,16], index: 3, kind: input, shape index: {}]
  %s4 = inlined_call_operand.vmem [shape: bf16[1,16], index: 4, kind: input, shape index: {}]
  %s5 = inlined_call_operand.vmem [shape: bf16[16,16], index: 5, kind: input, shape index: {}]
  %s6 = inlined_call_operand.vmem [shape: f32[1,16], index: 6, kind: input, shape index: {}]
  %s7 = inlined_call_operand.vmem [shape: f32[50,16], index: 7, kind: output, shape index: {}]
  %s8 = sld [smem:[#allocation0]]
  $region109: #{tpu_custom_call.1} parent=0
    _
  %s10 = ssub.s32 1, %s8
  %s11 = scalar_select 0, %s10, %s8
  $region1: #{tpu_custom_call.1} parent=0
    #allocation2 [shape = 'u8[16384]{0}', space=vmem, size = 0x4000, scoped, tag = 'output window, operand 0']
    loop: start=0, step=1, limit=6
    $region2: #{tpu_custom_call.1} parent=1 // loop_pre_header
      _
    $region3: #{tpu_custom_call.1} parent=1 // loop_header
      %s13 = sphi 0, %s17
      %p14 = scmp.ge.s32.totalorder %s13, 6
      %s23 = sphi 0, %s25
      %s26 = sphi 0, %s23
      %s27 = sphi 0, %s26
      %s43 = sphi 0, %s27
      %s47 = sphi 0, %s47
      %s49 = sphi 0, %s47
      %s50 = sphi 0, %s49
      %s64 = sphi 0, %s50
      %s68 = sphi 0, %s68
      %s70 = sphi 0, %s68
      %s71 = sphi 0, %s70
      %s85 = sphi 0, %s71
      %s89 = sphi 0, %s89
      %s91 = sphi 0, %s89
      %s92 = sphi 0, %s91
      %s106 = sphi 0, %s92
      %s110 = sphi 0, %s110
      %s112 = sphi 0, %s110
      %s113 = sphi 0, %s112
      %s127 = sphi 0, %s113
      %s131 = sphi 0, %s131
      %s133 = sphi 0, %s131
      %s134 = sphi 0, %s133
      %s148 = sphi 0, %s134
      %s152 = sphi 0, %s152
      %s154 = sphi 0, %s152
      %s155 = sphi 0, %s154
      %s169 = sphi 0, %s155
      %s175 = sphi 0, %s177
      %s178 = sphi 0, %s175
      %s179 = sphi 0, %s178
      %s195 = sphi 0, %s179
    $region4: #{tpu_custom_call.1} parent=1 // loop_header_branch
      %16 = sbr.rel (%p14) target = $region8
    $region5: #{tpu_custom_call.1} parent=1 // loop_body
      %s18 = ssub.s32 %s13, 1
      %s19 = ssub.s32 %s13, 2
      %s20 = sadd.s32 %s13, 1
      %s21 = ssub.s32 %s13, %s20
      %p22 = scmp.eq.s32.totalorder %s21, 0
      %s24 = sadd.s32 %s23, 1
      %s25 = scalar_select %p22, %s23, %s24
      %p28 = pneg %p22
      %p29 = scmp.eq.s32.totalorder %s13, 3
      %p30 = por %p28, %p29
      %p31 = scmp.ne.s32.totalorder %s23, %s26
      %p32 = scmp.eq.s32.totalorder %s13, 0
      %p33 = por %p31, %p32
      %p34 = scmp.ne.s32.totalorder %s23, %s26
      %p35 = scmp.eq.s32.totalorder %s18, 3
      %p36 = por %p34, %p35
      %p37 = scmp.ne.s32.totalorder %s26, %s27
      %p38 = scmp.eq.s32.totalorder %s18, 0
      %p39 = por %p37, %p38
      %p40 = scmp.ne.s32.totalorder %s26, %s27
      %p41 = scmp.eq.s32.totalorder %s19, 3
      %p42 = por %p40, %p41
      %p44 = scmp.ne.s32.totalorder %s27, %s43
      %p45 = scmp.eq.s32.totalorder %s19, 0
      %p46 = por %p44, %p45
      %s48 = sadd.s32 %s47, 1
      %p51 = scmp.eq.s32.totalorder %s13, 3
      %p52 = scmp.ne.s32.totalorder %s47, %s49
      %p53 = scmp.eq.s32.totalorder %s13, 0
      %p54 = por %p52, %p53
      %p55 = scmp.ne.s32.totalorder %s47, %s49
      %p56 = scmp.eq.s32.totalorder %s18, 3
      %p57 = por %p55, %p56
      %p58 = scmp.ne.s32.totalorder %s49, %s50
      %p59 = scmp.eq.s32.totalorder %s18, 0
      %p60 = por %p58, %p59
      %p61 = scmp.ne.s32.totalorder %s49, %s50
      %p62 = scmp.eq.s32.totalorder %s19, 3
      %p63 = por %p61, %p62
      %p65 = scmp.ne.s32.totalorder %s50, %s64
      %p66 = scmp.eq.s32.totalorder %s19, 0
      %p67 = por %p65, %p66
      %s69 = sadd.s32 %s68, 1
      %p72 = scmp.eq.s32.totalorder %s13, 3
      %p73 = scmp.ne.s32.totalorder %s68, %s70
      %p74 = scmp.eq.s32.totalorder %s13, 0
      %p75 = por %p73, %p74
      %p76 = scmp.ne.s32.totalorder %s68, %s70
      %p77 = scmp.eq.s32.totalorder %s18, 3
      %p78 = por %p76, %p77
      %p79 = scmp.ne.s32.totalorder %s70, %s71
      %p80 = scmp.eq.s32.totalorder %s18, 0
      %p81 = por %p79, %p80
      %p82 = scmp.ne.s32.totalorder %s70, %s71
      %p83 = scmp.eq.s32.totalorder %s19, 3
      %p84 = por %p82, %p83
      %p86 = scmp.ne.s32.totalorder %s71, %s85
      %p87 = scmp.eq.s32.totalorder %s19, 0
      %p88 = por %p86, %p87
      %s90 = sadd.s32 %s89, 1
      %p93 = scmp.eq.s32.totalorder %s13, 3
      %p94 = scmp.ne.s32.totalorder %s89, %s91
      %p95 = scmp.eq.s32.totalorder %s13, 0
      %p96 = por %p94, %p95
      %p97 = scmp.ne.s32.totalorder %s89, %s91
      %p98 = scmp.eq.s32.totalorder %s18, 3
      %p99 = por %p97, %p98
      %p100 = scmp.ne.s32.totalorder %s91, %s92
      %p101 = scmp.eq.s32.totalorder %s18, 0
      %p102 = por %p100, %p101
      %p103 = scmp.ne.s32.totalorder %s91, %s92
      %p104 = scmp.eq.s32.totalorder %s19, 3
      %p105 = por %p103, %p104
      %p107 = scmp.ne.s32.totalorder %s92, %s106
      %p108 = scmp.eq.s32.totalorder %s19, 0
      %p109 = por %p107, %p108
      %s111 = sadd.s32 %s110, 1
      %p114 = scmp.eq.s32.totalorder %s13, 3
      %p115 = scmp.ne.s32.totalorder %s110, %s112
      %p116 = scmp.eq.s32.totalorder %s13, 0
      %p117 = por %p115, %p116
      %p118 = scmp.ne.s32.totalorder %s110, %s112
      %p119 = scmp.eq.s32.totalorder %s18, 3
      %p120 = por %p118, %p119
      %p121 = scmp.ne.s32.totalorder %s112, %s113
      %p122 = scmp.eq.s32.totalorder %s18, 0
      %p123 = por %p121, %p122
      %p124 = scmp.ne.s32.totalorder %s112, %s113
      %p125 = scmp.eq.s32.totalorder %s19, 3
      %p126 = por %p124, %p125
      %p128 = scmp.ne.s32.totalorder %s113, %s127
      %p129 = scmp.eq.s32.totalorder %s19, 0
      %p130 = por %p128, %p129
      %s132 = sadd.s32 %s131, 1
      %p135 = scmp.eq.s32.totalorder %s13, 3
      %p136 = scmp.ne.s32.totalorder %s131, %s133
      %p137 = scmp.eq.s32.totalorder %s13, 0
      %p138 = por %p136, %p137
      %p139 = scmp.ne.s32.totalorder %s131, %s133
      %p140 = scmp.eq.s32.totalorder %s18, 3
      %p141 = por %p139, %p140
      %p142 = scmp.ne.s32.totalorder %s133, %s134
      %p143 = scmp.eq.s32.totalorder %s18, 0
      %p144 = por %p142, %p143
      %p145 = scmp.ne.s32.totalorder %s133, %s134
      %p146 = scmp.eq.s32.totalorder %s19, 3
      %p147 = por %p145, %p146
      %p149 = scmp.ne.s32.totalorder %s134, %s148
      %p150 = scmp.eq.s32.totalorder %s19, 0
      %p151 = por %p149, %p150
      %s153 = sadd.s32 %s152, 1
      %p156 = scmp.eq.s32.totalorder %s13, 3
      %p157 = scmp.ne.s32.totalorder %s152, %s154
      %p158 = scmp.eq.s32.totalorder %s13, 0
      %p159 = por %p157, %p158
      %p160 = scmp.ne.s32.totalorder %s152, %s154
      %p161 = scmp.eq.s32.totalorder %s18, 3
      %p162 = por %p160, %p161
      %p163 = scmp.ne.s32.totalorder %s154, %s155
      %p164 = scmp.eq.s32.totalorder %s18, 0
      %p165 = por %p163, %p164
      %p166 = scmp.ne.s32.totalorder %s154, %s155
      %p167 = scmp.eq.s32.totalorder %s19, 3
      %p168 = por %p166, %p167
      %p170 = scmp.ne.s32.totalorder %s155, %s169
      %p171 = scmp.eq.s32.totalorder %s19, 0
      %p172 = por %p170, %p171
      %s173 = ssub.s32 %s13, %s20
      %p174 = scmp.eq.s32.totalorder %s173, 0
      %s176 = sadd.s32 %s175, 1
      %s177 = scalar_select %p174, %s175, %s176
      %p180 = pneg %p174
      %p181 = scmp.eq.s32.totalorder %s13, 3
      %p182 = por %p180, %p181
      %p183 = scmp.ne.s32.totalorder %s175, %s178
      %p184 = scmp.eq.s32.totalorder %s13, 0
      %p185 = por %p183, %p184
      %p186 = scmp.ne.s32.totalorder %s175, %s178
      %p187 = scmp.eq.s32.totalorder %s18, 3
      %p188 = por %p186, %p187
      %p189 = scmp.ne.s32.totalorder %s178, %s179
      %p190 = scmp.eq.s32.totalorder %s18, 0
      %p191 = por %p189, %p190
      %p192 = scmp.ne.s32.totalorder %s178, %s179
      %p193 = scmp.eq.s32.totalorder %s19, 3
      %p194 = por %p192, %p193
      %p196 = scmp.ne.s32.totalorder %s179, %s195
      %p197 = scmp.eq.s32.totalorder %s19, 0
      %p198 = por %p196, %p197
      %p199 = scmp.le.s32.totalorder 1, %s13
      %p200 = scmp.lt.s32.totalorder %s13, 5
      %p201 = pnand %p199, %p200
      %p202 = pneg %p201
      // Predicated region
      $region9: #{tpu_custom_call.1} parent=5 // pred_check
        _
      $region10: #{tpu_custom_call.1} parent=5 // pred_check_branch
        %204 = sbr.rel (%p201) target = $region12
      $region11: #{tpu_custom_call.1} parent=5 // pred_region
        %s205 = ssub.s32 %s13, 1
        // Predicated region
        $region13: #{tpu_custom_call.1} parent=11 // pred_check
          %p206 = pneg %p60
        $region14: #{tpu_custom_call.1} parent=11 // pred_check_branch
          %208 = sbr.rel (%p206) target = $region16
        $region15: #{tpu_custom_call.1} parent=11 // pred_region
          _
        $region16: #{tpu_custom_call.1} parent=11 // pred_fallthru
          _
        // Predicated region
        $region17: #{tpu_custom_call.1} parent=11 // pred_check
          %p209 = pneg %p81
        $region18: #{tpu_custom_call.1} parent=11 // pred_check_branch
          %211 = sbr.rel (%p209) target = $region20
        $region19: #{tpu_custom_call.1} parent=11 // pred_region
          _
        $region20: #{tpu_custom_call.1} parent=11 // pred_fallthru
          _
        // Predicated region
        $region21: #{tpu_custom_call.1} parent=11 // pred_check
          %p212 = pneg %p102
        $region22: #{tpu_custom_call.1} parent=11 // pred_check_branch
          %214 = sbr.rel (%p212) target = $region24
        $region23: #{tpu_custom_call.1} parent=11 // pred_region
          _
        $region24: #{tpu_custom_call.1} parent=11 // pred_fallthru
          _
        // Predicated region
        $region25: #{tpu_custom_call.1} parent=11 // pred_check
          %p215 = pneg %p123
        $region26: #{tpu_custom_call.1} parent=11 // pred_check_branch
          %217 = sbr.rel (%p215) target = $region28
        $region27: #{tpu_custom_call.1} parent=11 // pred_region
          _
        $region28: #{tpu_custom_call.1} parent=11 // pred_fallthru
          _
        // Predicated region
        $region29: #{tpu_custom_call.1} parent=11 // pred_check
          %p218 = pneg %p144
        $region30: #{tpu_custom_call.1} parent=11 // pred_check_branch
          %220 = sbr.rel (%p218) target = $region32
        $region31: #{tpu_custom_call.1} parent=11 // pred_region
          _
        $region32: #{tpu_custom_call.1} parent=11 // pred_fallthru
          _
        // Predicated region
        $region33: #{tpu_custom_call.1} parent=11 // pred_check
          %p221 = pneg %p165
        $region34: #{tpu_custom_call.1} parent=11 // pred_check_branch
          %223 = sbr.rel (%p221) target = $region36
        $region35: #{tpu_custom_call.1} parent=11 // pred_region
          _
        $region36: #{tpu_custom_call.1} parent=11 // pred_fallthru
          _
      $region12: #{tpu_custom_call.1} parent=5 // pred_fallthru
        _
      %p224 = scmp.lt.s32.totalorder %s13, 4
      // Predicated region
      $region37: #{tpu_custom_call.1} parent=5 // pred_check
        %p225 = pneg %p224
      $region38: #{tpu_custom_call.1} parent=5 // pred_check_branch
        %227 = sbr.rel (%p225) target = $region40
      $region39: #{tpu_custom_call.1} parent=5 // pred_region
        // Predicated region
        $region41: #{tpu_custom_call.1} parent=39 // pred_check
          %p228 = pneg %p33
        $region42: #{tpu_custom_call.1} parent=39 // pred_check_branch
          %230 = sbr.rel (%p228) target = $region44
        $region43: #{tpu_custom_call.1} parent=39 // pred_region
          %s231 = smul.u32 2, %s13
          %s232 = ssub.s32 7, %s231
          %p233 = scmp.lt.s32.totalorder %s232, 2
          %s234 = scalar_select %p233, %s232, 2
          %s235 = smul.u32 8, %s234
          %p236 = scmp.lt.s32.totalorder %s231, 6
          %s237 = scalar_select %p236, %s231, 6
          %s238 = smul.addr %s237, 8
          %s239 = scalar_lea.vmem %s0, %s238
          %s240 = smul.u32 2, %s13
          %s241 = ssub.s32 7, %s240
          %p242 = scmp.lt.s32.totalorder %s241, 2
          %s243 = scalar_select %p242, %s241, 2
          %s244 = smul.u32 8, %s243
        $region44: #{tpu_custom_call.1} parent=39 // pred_fallthru
          _
      $region40: #{tpu_custom_call.1} parent=5 // pred_fallthru
        _
      %p245 = scmp.le.s32.totalorder 1, %s13
      %p246 = scmp.lt.s32.totalorder %s13, 5
      %p247 = pnand %p245, %p246
      %p248 = pneg %p247
      // Predicated region
      $region45: #{tpu_custom_call.1} parent=5 // pred_check
        _
      $region46: #{tpu_custom_call.1} parent=5 // pred_check_branch
        %250 = sbr.rel (%p247) target = $region48
      $region47: #{tpu_custom_call.1} parent=5 // pred_region
        %s251 = ssub.s32 %s13, 1
        %s252 = smul.u32 2, %s18
        %s253 = ssub.s32 7, %s252
        %p254 = scmp.lt.s32.totalorder %s253, 2
        %s255 = scalar_select %p254, %s253, 2
        %s256 = smul.u32 8, %s255
        %p257 = scmp.lt.s32.totalorder %s252, 6
        %s258 = scalar_select %p257, %s252, 6
        %s259 = smul.addr %s258, 8
        %s260 = scalar_lea.vmem %s0, %s259
        %p261 = pneg %p39
        %p262 = pneg %p36
        %p263 = pneg %p60
        %p264 = pneg %p57
        %p265 = pneg %p81
        %p266 = pneg %p78
        %p267 = pneg %p102
        %p268 = pneg %p99
        %p269 = pneg %p123
        %p270 = pneg %p120
        %p271 = pneg %p144
        %p272 = pneg %p141
        %p273 = pneg %p165
        %p274 = pneg %p162
        %p275 = pneg %p191
        %p276 = pneg %p188
        %s277 = sand.u32 %s178, 1
        %s278 = sand.u32 %s178, 1
        %s279 = smul.addr %s278, 16
        %s280 = scalar_lea.vmem [#allocation2], %s279
        %s281 = smul.u32 2, %s18
        %s282 = ssub.s32 7, %s281
        %p283 = scmp.lt.s32.totalorder %s282, 2
        %s284 = scalar_select %p283, %s282, 2
        %s285 = smul.u32 8, %s284
        %p286 = scmp.lt.s32.totalorder %s281, 6
        %s287 = scalar_select %p286, %s281, 6
        %s288 = smul.addr %s287, 8
        %s289 = scalar_lea.vmem %s0, %s288
        %s290 = smul.u32 2, %s18
        %s291 = ssub.s32 7, %s290
        %p292 = scmp.lt.s32.totalorder %s291, 2
        %s293 = scalar_select %p292, %s291, 2
        %s294 = smul.u32 8, %s293
        %s295 = smul.u32 2, %s18
        %s296 = ssub.s32 7, %s295
        %p297 = scmp.lt.s32.totalorder %s296, 2
        %s298 = scalar_select %p297, %s296, 2
        %s299 = smul.u32 8, %s298
        %v301 = vld [vmem:[%s289] sm:$0xff]
        %v302 = vld [vmem:[%s289 + $0x8] sm:$0xff]
        %v303 = vpack.c.bf16 %v302, %v301
        %v304 = vld [vmem:[%s1] sm:$0xf]
        %v305 = vld [vmem:[%s1 + $0x4] sm:$0xf]
        %v306 = vld [vmem:[%s1 + $0x8] sm:$0xf]
        %v307 = vld [vmem:[%s1 + $0xc] sm:$0xf]
        %v312 = vunpack.c.l.b16 %v304
        %v313 = vunpack.c.l.b16 %v305
        %v314 = vunpack.c.l.b16 %v306
        %v315 = vunpack.c.l.b16 %v307
        %v316 = vpack.c.b16 %v313, %v312
        %v317 = vpack.c.b16 %v315, %v314
        %vm320 = vcmask 261120
        %v322 = vsel %vm320, %v303, 0
        %324 = vmatpush.bf16.msra.mxu0 0
        %325 = vmatpush.bf16.msra.mxu0 0
        %326 = vmatpush.bf16.msra.mxu0 0
        %327 = vmatpush.bf16.msra.mxu0 0
        %328 = vmatpush.bf16.msra.mxu0 0
        %329 = vmatpush.bf16.msra.mxu0 0
        %330 = vmatpush.bf16.msra.mxu0 %v317
        %331 = vmatpush.bf16.msra.mxu0 %v316
        %332 = vmatmul.bf16.gmra.mxu0 %v322
        %v333 = vpop.f32.mrf.mxu0
        %v334 = vadd.f32 0.0, %v333
        %v335 = vpop.f32.mrf.mxu0
        %v336 = vadd.f32 0.0, %v335
        %337 = vdwg.mxu0
        %v338 = vpack.c.bf16 %v334, %v334
        %v339 = vpack.c.bf16 %v336, %v336
        %v340 = vld [vmem:[%s2] sm:$0x1]
        %v342 = vpack.i.b16 %v340, %v340
        %v344 = vperm.slane %v342, 0
        %v345 = vunpack.c.l.bf16 %v338
        %v346 = vunpack.c.l.bf16 %v339
        %v347 = vunpack.c.l.bf16 %v344
        %v348 = vadd.f32 %v345, %v347
        %v349 = vadd.f32 %v346, %v347
        %v350 = vpack.c.bf16 %v348, %v348
        %v351 = vpack.c.bf16 %v349, %v349
        %v352 = vunpack.c.l.bf16 %v350
        %v353 = vunpack.c.l.bf16 %v351
        %v354 = vmax.f32 %v352, 0.0
        %v355 = vmax.f32 %v353, 0.0
        %v356 = vpack.c.bf16 %v355, %v354
        %v357 = vld [vmem:[%s3] sm:$0xf]
        %v358 = vld [vmem:[%s3 + $0x4] sm:$0xf]
        %v359 = vld [vmem:[%s3 + $0x8] sm:$0xf]
        %v360 = vld [vmem:[%s3 + $0xc] sm:$0xf]
        %v361 = vld [vmem:[%s3 + $0x10] sm:$0xf]
        %v362 = vld [vmem:[%s3 + $0x14] sm:$0xf]
        %v363 = vld [vmem:[%s3 + $0x18] sm:$0xf]
        %v364 = vld [vmem:[%s3 + $0x1c] sm:$0xf]
        %v373 = vunpack.c.l.b16 %v357
        %v374 = vunpack.c.l.b16 %v358
        %v375 = vunpack.c.l.b16 %v359
        %v376 = vunpack.c.l.b16 %v360
        %v377 = vunpack.c.l.b16 %v361
        %v378 = vunpack.c.l.b16 %v362
        %v379 = vunpack.c.l.b16 %v363
        %v380 = vunpack.c.l.b16 %v364
        %v381 = vpack.c.b16 %v374, %v373
        %v382 = vpack.c.b16 %v376, %v375
        %v383 = vpack.c.b16 %v378, %v377
        %v384 = vpack.c.b16 %v380, %v379
        %vm389 = vcmask 523264
        %v391 = vsel %vm389, %v356, 0
        %393 = vmatpush.bf16.msra.mxu0 0
        %394 = vmatpush.bf16.msra.mxu0 0
        %395 = vmatpush.bf16.msra.mxu0 0
        %396 = vmatpush.bf16.msra.mxu0 0
        %397 = vmatpush.bf16.msra.mxu0 %v384
        %398 = vmatpush.bf16.msra.mxu0 %v383
        %399 = vmatpush.bf16.msra.mxu0 %v382
        %400 = vmatpush.bf16.msra.mxu0 %v381
        %401 = vmatmul.bf16.gmra.mxu0 %v391
        %v402 = vpop.f32.mrf.mxu0
        %v403 = vadd.f32 0.0, %v402
        %v404 = vpop.f32.mrf.mxu0
        %v405 = vadd.f32 0.0, %v404
        %406 = vdwg.mxu0
        %v407 = vpack.c.bf16 %v403, %v403
        %v408 = vpack.c.bf16 %v405, %v405
        %v409 = vld [vmem:[%s4] sm:$0x1]
        %v411 = vpack.i.b16 %v409, %v409
        %v413 = vperm.slane %v411, 0
        %v414 = vunpack.c.l.bf16 %v407
        %v415 = vunpack.c.l.bf16 %v408
        %v416 = vunpack.c.l.bf16 %v413
        %v417 = vadd.f32 %v414, %v416
        %v418 = vadd.f32 %v415, %v416
        %v419 = vpack.c.bf16 %v417, %v417
        %v420 = vpack.c.bf16 %v418, %v418
        %v421 = vunpack.c.l.bf16 %v419
        %v422 = vunpack.c.l.bf16 %v420
        %v423 = vmax.f32 %v421, 0.0
        %v424 = vmax.f32 %v422, 0.0
        %v425 = vpack.c.bf16 %v424, %v423
        %v426 = vld [vmem:[%s5] sm:$0xf]
        %v427 = vld [vmem:[%s5 + $0x4] sm:$0xf]
        %v428 = vld [vmem:[%s6] sm:$0x1]
        %v430 = vperm.slane %v428, 0
        %v434 = vunpack.c.l.b16 %v426
        %v435 = vunpack.c.l.b16 %v427
        %v436 = vpack.c.b16 %v435, %v434
        %vm438 = vcmask 130048
        %v440 = vsel %vm438, %v425, 0
        %442 = vmatpush.bf16.msra.mxu0 0
        %443 = vmatpush.bf16.msra.mxu0 0
        %444 = vmatpush.bf16.msra.mxu0 0
        %445 = vmatpush.bf16.msra.mxu0 0
        %446 = vmatpush.bf16.msra.mxu0 0
        %447 = vmatpush.bf16.msra.mxu0 0
        %448 = vmatpush.bf16.msra.mxu0 0
        %449 = vmatpush.bf16.msra.mxu0 %v436
        %450 = vmatmul.bf16.gmra.mxu0 %v440
        %v451 = vpop.f32.mrf.mxu0
        %v452 = vadd.f32 %v430, %v451
        %v453 = vpop.f32.mrf.mxu0
        %v454 = vadd.f32 %v430, %v453
        %455 = vdwg.mxu0
        %456 = vst.msk [vmem:[%s280] sm:$0xff] %vm438, %v452
        %457 = vst.msk [vmem:[%s280 + $0x8] sm:$0xff] %vm438, %v454
        %s458 = sand.u32 %s178, 1
        %s459 = sand.u32 %s178, 1
        %s460 = smul.addr %s459, 16
        %s461 = scalar_lea.vmem [#allocation2], %s460
        // Predicated region
        $region49: #{tpu_custom_call.1} parent=47 // pred_check
          %p462 = pneg %p188
        $region50: #{tpu_custom_call.1} parent=47 // pred_check_branch
          %464 = sbr.rel (%p462) target = $region52
        $region51: #{tpu_custom_call.1} parent=47 // pred_region
          %s465 = smul.u32 2, %s18
          %s466 = ssub.s32 7, %s465
          %p467 = scmp.lt.s32.totalorder %s466, 2
          %s468 = scalar_select %p467, %s466, 2
          %s469 = smul.u32 8, %s468
          %p470 = scmp.ne.s32.totalorder 0, %s469
          %s471 = smul.addr %s465, 8
          %s472 = scalar_lea.vmem %s7, %s471
          // Predicated region
          $region53: #{tpu_custom_call.1} parent=51 // pred_check
            %p473 = pneg %p470
          $region54: #{tpu_custom_call.1} parent=51 // pred_check_branch
            %475 = sbr.rel (%p473) target = $region56
          $region55: #{tpu_custom_call.1} parent=51 // pred_region
            // Predicated region
            $region57: #{tpu_custom_call.1} parent=55 // pred_check
              _
            $region58: #{tpu_custom_call.1} parent=55 // pred_check_branch
              %477 = sbr.rel (0) target = $region60
            $region59: #{tpu_custom_call.1} parent=55 // pred_region
              // Predicated region
              $region79: #{tpu_custom_call.1} parent=59 // pred_check
                _
              $region80: #{tpu_custom_call.1} parent=59 // pred_check_branch
                %529 = sbr.rel (0) target = $region82
              $region81: #{tpu_custom_call.1} parent=59 // pred_region
                %s530 = sshrl.u32 %s468, 1
                // While loop
                $region83: #{tpu_custom_call.1} parent=81 // loop_pre_header
                  _
                $region84: #{tpu_custom_call.1} parent=81 // loop_header
                  %s532 = sphi 0, %s534
                  %p533 = scmp.ge.s32.totalorder %s532, %s530
                  %s537 = sphi 0, %s546
                  %s538 = sphi %s461, %s549
                  %s539 = sphi %s472, %s550
                $region85: #{tpu_custom_call.1} parent=81 // loop_header_branch
                  %536 = sbr.rel (%p533) target = $region89
                $region86: #{tpu_custom_call.1} parent=81 // loop_body
                  %v540 = vld [vmem:[%s538] sm:$0xff]
                  %541 = vst [vmem:[%s539] sm:$0xff] %v540
                  %v542 = vld [vmem:[%s538 + $0x8] sm:$0xff]
                  %543 = vst [vmem:[%s539 + $0x8] sm:$0xff] %v542
                  %s544 = sadd.s32 1, %s537
                  %p545 = scmp.ge.s32.totalorder %s544, %s530
                  %s546 = scalar_select %p545, 0, %s544
                  %s547 = smul.u32 %s546, 16
                  %s548 = smul.u32 %s546, 16
                  %s549 = scalar_lea.vmem %s461, %s547 [#allocation2]
                  %s550 = scalar_lea.vmem %s472, %s548
                $region87: #{tpu_custom_call.1} parent=81 // loop_footer
                  %s534 = sadd.s32 %s532, 1
                $region88: #{tpu_custom_call.1} parent=81 // loop_footer_branch
                  %531 = sbr.rel target = $region84
                $region89: #{tpu_custom_call.1} parent=81 // loop_exit
                  _
                %s551 = sshrl.u32 %s468, 1
                %s552 = sand.u32 %s468, 1
                %s553 = smul.u32 %s551, 2
                %s554 = smul.u32 8, %s553
                %s555 = scalar_lea.vmem %s461, %s554 [#allocation2]
                %s556 = smul.u32 8, %s553
                %s557 = scalar_lea.vmem %s472, %s556
                // While loop
                $region90: #{tpu_custom_call.1} parent=81 // loop_pre_header
                  _
                $region91: #{tpu_custom_call.1} parent=81 // loop_header
                  %s559 = sphi 0, %s561
                  %p560 = scmp.ge.s32.totalorder %s559, %s552
                  %s564 = sphi 0, %s571
                  %s565 = sphi %s555, %s574
                  %s566 = sphi %s557, %s575
                $region92: #{tpu_custom_call.1} parent=81 // loop_header_branch
                  %563 = sbr.rel (%p560) target = $region96
                $region93: #{tpu_custom_call.1} parent=81 // loop_body
                  %v567 = vld [vmem:[%s565] sm:$0xff]
                  %568 = vst [vmem:[%s566] sm:$0xff] %v567
                  %s569 = sadd.s32 1, %s564
                  %p570 = scmp.ge.s32.totalorder %s569, %s552
                  %s571 = scalar_select %p570, 0, %s569
                  %s572 = smul.u32 %s571, 8
                  %s573 = smul.u32 %s571, 8
                  %s574 = scalar_lea.vmem %s555, %s572 [#allocation2]
                  %s575 = scalar_lea.vmem %s557, %s573
                $region94: #{tpu_custom_call.1} parent=81 // loop_footer
                  %s561 = sadd.s32 %s559, 1
                $region95: #{tpu_custom_call.1} parent=81 // loop_footer_branch
                  %558 = sbr.rel target = $region91
                $region96: #{tpu_custom_call.1} parent=81 // loop_exit
                  _
              $region82: #{tpu_custom_call.1} parent=59 // pred_fallthru
                _
              // Predicated region
              $region97: #{tpu_custom_call.1} parent=59 // pred_check
                _
              $region98: #{tpu_custom_call.1} parent=59 // pred_check_branch
                %577 = sbr.rel target = $region100
              $region99: #{tpu_custom_call.1} parent=59 // pred_region
                _
              $region100: #{tpu_custom_call.1} parent=59 // pred_fallthru
                _
            $region60: #{tpu_custom_call.1} parent=55 // pred_fallthru
              _
            // Predicated region
            $region61: #{tpu_custom_call.1} parent=55 // pred_check
              _
            $region62: #{tpu_custom_call.1} parent=55 // pred_check_branch
              %479 = sbr.rel target = $region64
            $region63: #{tpu_custom_call.1} parent=55 // pred_region
              %s481 = ssub.s32 256, 1
              %s482 = sshrl.u32 %s468, 1
              // While loop
              $region65: #{tpu_custom_call.1} parent=63 // loop_pre_header
                _
              $region66: #{tpu_custom_call.1} parent=63 // loop_header
                %s484 = sphi 0, %s486
                %p485 = scmp.ge.s32.totalorder %s484, %s482
                %s489 = sphi 0, %s498
                %s490 = sphi %s461, %s501
                %s491 = sphi %s472, %s502
              $region67: #{tpu_custom_call.1} parent=63 // loop_header_branch
                %488 = sbr.rel (%p485) target = $region71
              $region68: #{tpu_custom_call.1} parent=63 // loop_body
                %v492 = vld [vmem:[%s490] sm:%s481]
                %493 = vst [vmem:[%s491] sm:%s481] %v492
                %v494 = vld [vmem:[%s490 + $0x8] sm:%s481]
                %495 = vst [vmem:[%s491 + $0x8] sm:%s481] %v494
                %s496 = sadd.s32 1, %s489
                %p497 = scmp.ge.s32.totalorder %s496, %s482
                %s498 = scalar_select %p497, 0, %s496
                %s499 = smul.u32 %s498, 16
                %s500 = smul.u32 %s498, 16
                %s501 = scalar_lea.vmem %s461, %s499 [#allocation2]
                %s502 = scalar_lea.vmem %s472, %s500
              $region69: #{tpu_custom_call.1} parent=63 // loop_footer
                %s486 = sadd.s32 %s484, 1
              $region70: #{tpu_custom_call.1} parent=63 // loop_footer_branch
                %483 = sbr.rel target = $region66
              $region71: #{tpu_custom_call.1} parent=63 // loop_exit
                _
              %s503 = sshrl.u32 %s468, 1
              %s504 = sand.u32 %s468, 1
              %s505 = smul.u32 %s503, 2
              %s506 = smul.u32 8, %s505
              %s507 = scalar_lea.vmem %s461, %s506 [#allocation2]
              %s508 = smul.u32 8, %s505
              %s509 = scalar_lea.vmem %s472, %s508
              // While loop
              $region72: #{tpu_custom_call.1} parent=63 // loop_pre_header
                _
              $region73: #{tpu_custom_call.1} parent=63 // loop_header
                %s511 = sphi 0, %s513
                %p512 = scmp.ge.s32.totalorder %s511, %s504
                %s516 = sphi 0, %s523
                %s517 = sphi %s507, %s526
                %s518 = sphi %s509, %s527
              $region74: #{tpu_custom_call.1} parent=63 // loop_header_branch
                %515 = sbr.rel (%p512) target = $region78
              $region75: #{tpu_custom_call.1} parent=63 // loop_body
                %v519 = vld [vmem:[%s517] sm:%s481]
                %520 = vst [vmem:[%s518] sm:%s481] %v519
                %s521 = sadd.s32 1, %s516
                %p522 = scmp.ge.s32.totalorder %s521, %s504
                %s523 = scalar_select %p522, 0, %s521
                %s524 = smul.u32 %s523, 8
                %s525 = smul.u32 %s523, 8
                %s526 = scalar_lea.vmem %s507, %s524 [#allocation2]
                %s527 = scalar_lea.vmem %s509, %s525
              $region76: #{tpu_custom_call.1} parent=63 // loop_footer
                %s513 = sadd.s32 %s511, 1
              $region77: #{tpu_custom_call.1} parent=63 // loop_footer_branch
                %510 = sbr.rel target = $region73
              $region78: #{tpu_custom_call.1} parent=63 // loop_exit
                _
            $region64: #{tpu_custom_call.1} parent=55 // pred_fallthru
              _
          $region56: #{tpu_custom_call.1} parent=51 // pred_fallthru
            _
          %578 = vnop
        $region52: #{tpu_custom_call.1} parent=47 // pred_fallthru
          _
      $region48: #{tpu_custom_call.1} parent=5 // pred_fallthru
        _
      %p579 = scmp.le.s32.totalorder 2, %s13
      // Predicated region
      $region101: #{tpu_custom_call.1} parent=5 // pred_check
        %p580 = pneg %p579
      $region102: #{tpu_custom_call.1} parent=5 // pred_check_branch
        %582 = sbr.rel (%p580) target = $region104
      $region103: #{tpu_custom_call.1} parent=5 // pred_region
        %s583 = ssub.s32 %s13, 2
        // Predicated region
        $region105: #{tpu_custom_call.1} parent=103 // pred_check
          %p584 = pneg %p194
        $region106: #{tpu_custom_call.1} parent=103 // pred_check_branch
          %586 = sbr.rel (%p584) target = $region108
        $region107: #{tpu_custom_call.1} parent=103 // pred_region
          %s587 = sand.u32 %s179, 1
          %s588 = sand.u32 %s179, 1
          %s589 = smul.addr %s588, 16
          %s590 = scalar_lea.vmem [#allocation2], %s589
        $region108: #{tpu_custom_call.1} parent=103 // pred_fallthru
          _
      $region104: #{tpu_custom_call.1} parent=5 // pred_fallthru
        _
    $region6: #{tpu_custom_call.1} parent=1 // loop_footer
      %s17 = sadd.s32 1, %s13
    $region7: #{tpu_custom_call.1} parent=1 // loop_footer_branch
      %12 = sbr.rel target = $region3
    $region8: #{tpu_custom_call.1} parent=1 // loop_exit
      _

// kernel: tpu_custom_call.1
$region0: #{tpu_custom_call.1}
  #allocation0 [shape = 'u32[]', space=smem, size = 0x4, offset = 0x4, fixed_abs, tag = 'smem constant byte address 0x4 - core index']
  #allocation1 [shape = 'u32[72,128]{1,0:T(1,128)}', space=vmem, size = 0x9000, scoped, tag = 'internal scratch']
  %s0 = inlined_call_operand.vmem [shape: f32[50,32], index: 0, kind: input, shape index: {}]
  %s1 = inlined_call_operand.vmem [shape: bf16[32,64], index: 1, kind: input, shape index: {}]
  %s2 = inlined_call_operand.vmem [shape: bf16[1,64], index: 2, kind: input, shape index: {}]
  %s3 = inlined_call_operand.vmem [shape: bf16[64,16], index: 3, kind: input, shape index: {}]
  %s4 = inlined_call_operand.vmem [shape: bf16[1,16], index: 4, kind: input, shape index: {}]
  %s5 = inlined_call_operand.vmem [shape: bf16[16,16], index: 5, kind: input, shape index: {}]
  %s6 = inlined_call_operand.vmem [shape: f32[1,16], index: 6, kind: input, shape index: {}]
  %s7 = inlined_call_operand.vmem [shape: f32[50,16], index: 7, kind: output, shape index: {}]
  %s8 = sld [smem:[#allocation0]]
  $region109: #{tpu_custom_call.1} parent=0
    _
  %s10 = ssub.s32 1, %s8
  %s11 = scalar_select 0, %s10, %s8
  $region1: #{tpu_custom_call.1} parent=0
    #allocation2 [shape = 'u8[16384]{0}', space=vmem, size = 0x4000, scoped, tag = 'output window, operand 0']
    loop: start=0, step=1, limit=6
    $region2: #{tpu_custom_call.1} parent=1 // loop_pre_header
      _
    $region3: #{tpu_custom_call.1} parent=1 // loop_header
      %s13 = sphi 0, %s17
      %p14 = scmp.ge.s32.totalorder %s13, 6
      %s23 = sphi 0, %s25
      %s26 = sphi 0, %s23
      %s27 = sphi 0, %s26
      %s43 = sphi 0, %s27
      %s47 = sphi 0, %s47
      %s49 = sphi 0, %s47
      %s50 = sphi 0, %s49
      %s64 = sphi 0, %s50
      %s68 = sphi 0, %s68
      %s70 = sphi 0, %s68
      %s71 = sphi 0, %s70
      %s85 = sphi 0, %s71
      %s89 = sphi 0, %s89
      %s91 = sphi 0, %s89
      %s92 = sphi 0, %s91
      %s106 = sphi 0, %s92
      %s110 = sphi 0, %s110
      %s112 = sphi 0, %s110
      %s113 = sphi 0, %s112
      %s127 = sphi 0, %s113
      %s131 = sphi 0, %s131
      %s133 = sphi 0, %s131
      %s134 = sphi 0, %s133
      %s148 = sphi 0, %s134
      %s152 = sphi 0, %s152
      %s154 = sphi 0, %s152
      %s155 = sphi 0, %s154
      %s169 = sphi 0, %s155
      %s175 = sphi 0, %s177
      %s178 = sphi 0, %s175
      %s179 = sphi 0, %s178
      %s195 = sphi 0, %s179
    $region4: #{tpu_custom_call.1} parent=1 // loop_header_branch
      %16 = sbr.rel (%p14) target = $region8
    $region5: #{tpu_custom_call.1} parent=1 // loop_body
      %s18 = ssub.s32 %s13, 1
      %s19 = ssub.s32 %s13, 2
      %s20 = sadd.s32 %s13, 1
      %s21 = ssub.s32 %s13, %s20
      %p22 = scmp.eq.s32.totalorder %s21, 0
      %s24 = sadd.s32 %s23, 1
      %s25 = scalar_select %p22, %s23, %s24
      %p28 = pneg %p22
      %p29 = scmp.eq.s32.totalorder %s13, 3
      %p30 = por %p28, %p29
      %p31 = scmp.ne.s32.totalorder %s23, %s26
      %p32 = scmp.eq.s32.totalorder %s13, 0
      %p33 = por %p31, %p32
      %p34 = scmp.ne.s32.totalorder %s23, %s26
      %p35 = scmp.eq.s32.totalorder %s18, 3
      %p36 = por %p34, %p35
      %p37 = scmp.ne.s32.totalorder %s26, %s27
      %p38 = scmp.eq.s32.totalorder %s18, 0
      %p39 = por %p37, %p38
      %p40 = scmp.ne.s32.totalorder %s26, %s27
      %p41 = scmp.eq.s32.totalorder %s19, 3
      %p42 = por %p40, %p41
      %p44 = scmp.ne.s32.totalorder %s27, %s43
      %p45 = scmp.eq.s32.totalorder %s19, 0
      %p46 = por %p44, %p45
      %s48 = sadd.s32 %s47, 1
      %p51 = scmp.eq.s32.totalorder %s13, 3
      %p52 = scmp.ne.s32.totalorder %s47, %s49
      %p53 = scmp.eq.s32.totalorder %s13, 0
      %p54 = por %p52, %p53
      %p55 = scmp.ne.s32.totalorder %s47, %s49
      %p56 = scmp.eq.s32.totalorder %s18, 3
      %p57 = por %p55, %p56
      %p58 = scmp.ne.s32.totalorder %s49, %s50
      %p59 = scmp.eq.s32.totalorder %s18, 0
      %p60 = por %p58, %p59
      %p61 = scmp.ne.s32.totalorder %s49, %s50
      %p62 = scmp.eq.s32.totalorder %s19, 3
      %p63 = por %p61, %p62
      %p65 = scmp.ne.s32.totalorder %s50, %s64
      %p66 = scmp.eq.s32.totalorder %s19, 0
      %p67 = por %p65, %p66
      %s69 = sadd.s32 %s68, 1
      %p72 = scmp.eq.s32.totalorder %s13, 3
      %p73 = scmp.ne.s32.totalorder %s68, %s70
      %p74 = scmp.eq.s32.totalorder %s13, 0
      %p75 = por %p73, %p74
      %p76 = scmp.ne.s32.totalorder %s68, %s70
      %p77 = scmp.eq.s32.totalorder %s18, 3
      %p78 = por %p76, %p77
      %p79 = scmp.ne.s32.totalorder %s70, %s71
      %p80 = scmp.eq.s32.totalorder %s18, 0
      %p81 = por %p79, %p80
      %p82 = scmp.ne.s32.totalorder %s70, %s71
      %p83 = scmp.eq.s32.totalorder %s19, 3
      %p84 = por %p82, %p83
      %p86 = scmp.ne.s32.totalorder %s71, %s85
      %p87 = scmp.eq.s32.totalorder %s19, 0
      %p88 = por %p86, %p87
      %s90 = sadd.s32 %s89, 1
      %p93 = scmp.eq.s32.totalorder %s13, 3
      %p94 = scmp.ne.s32.totalorder %s89, %s91
      %p95 = scmp.eq.s32.totalorder %s13, 0
      %p96 = por %p94, %p95
      %p97 = scmp.ne.s32.totalorder %s89, %s91
      %p98 = scmp.eq.s32.totalorder %s18, 3
      %p99 = por %p97, %p98
      %p100 = scmp.ne.s32.totalorder %s91, %s92
      %p101 = scmp.eq.s32.totalorder %s18, 0
      %p102 = por %p100, %p101
      %p103 = scmp.ne.s32.totalorder %s91, %s92
      %p104 = scmp.eq.s32.totalorder %s19, 3
      %p105 = por %p103, %p104
      %p107 = scmp.ne.s32.totalorder %s92, %s106
      %p108 = scmp.eq.s32.totalorder %s19, 0
      %p109 = por %p107, %p108
      %s111 = sadd.s32 %s110, 1
      %p114 = scmp.eq.s32.totalorder %s13, 3
      %p115 = scmp.ne.s32.totalorder %s110, %s112
      %p116 = scmp.eq.s32.totalorder %s13, 0
      %p117 = por %p115, %p116
      %p118 = scmp.ne.s32.totalorder %s110, %s112
      %p119 = scmp.eq.s32.totalorder %s18, 3
      %p120 = por %p118, %p119
      %p121 = scmp.ne.s32.totalorder %s112, %s113
      %p122 = scmp.eq.s32.totalorder %s18, 0
      %p123 = por %p121, %p122
      %p124 = scmp.ne.s32.totalorder %s112, %s113
      %p125 = scmp.eq.s32.totalorder %s19, 3
      %p126 = por %p124, %p125
      %p128 = scmp.ne.s32.totalorder %s113, %s127
      %p129 = scmp.eq.s32.totalorder %s19, 0
      %p130 = por %p128, %p129
      %s132 = sadd.s32 %s131, 1
      %p135 = scmp.eq.s32.totalorder %s13, 3
      %p136 = scmp.ne.s32.totalorder %s131, %s133
      %p137 = scmp.eq.s32.totalorder %s13, 0
      %p138 = por %p136, %p137
      %p139 = scmp.ne.s32.totalorder %s131, %s133
      %p140 = scmp.eq.s32.totalorder %s18, 3
      %p141 = por %p139, %p140
      %p142 = scmp.ne.s32.totalorder %s133, %s134
      %p143 = scmp.eq.s32.totalorder %s18, 0
      %p144 = por %p142, %p143
      %p145 = scmp.ne.s32.totalorder %s133, %s134
      %p146 = scmp.eq.s32.totalorder %s19, 3
      %p147 = por %p145, %p146
      %p149 = scmp.ne.s32.totalorder %s134, %s148
      %p150 = scmp.eq.s32.totalorder %s19, 0
      %p151 = por %p149, %p150
      %s153 = sadd.s32 %s152, 1
      %p156 = scmp.eq.s32.totalorder %s13, 3
      %p157 = scmp.ne.s32.totalorder %s152, %s154
      %p158 = scmp.eq.s32.totalorder %s13, 0
      %p159 = por %p157, %p158
      %p160 = scmp.ne.s32.totalorder %s152, %s154
      %p161 = scmp.eq.s32.totalorder %s18, 3
      %p162 = por %p160, %p161
      %p163 = scmp.ne.s32.totalorder %s154, %s155
      %p164 = scmp.eq.s32.totalorder %s18, 0
      %p165 = por %p163, %p164
      %p166 = scmp.ne.s32.totalorder %s154, %s155
      %p167 = scmp.eq.s32.totalorder %s19, 3
      %p168 = por %p166, %p167
      %p170 = scmp.ne.s32.totalorder %s155, %s169
      %p171 = scmp.eq.s32.totalorder %s19, 0
      %p172 = por %p170, %p171
      %s173 = ssub.s32 %s13, %s20
      %p174 = scmp.eq.s32.totalorder %s173, 0
      %s176 = sadd.s32 %s175, 1
      %s177 = scalar_select %p174, %s175, %s176
      %p180 = pneg %p174
      %p181 = scmp.eq.s32.totalorder %s13, 3
      %p182 = por %p180, %p181
      %p183 = scmp.ne.s32.totalorder %s175, %s178
      %p184 = scmp.eq.s32.totalorder %s13, 0
      %p185 = por %p183, %p184
      %p186 = scmp.ne.s32.totalorder %s175, %s178
      %p187 = scmp.eq.s32.totalorder %s18, 3
      %p188 = por %p186, %p187
      %p189 = scmp.ne.s32.totalorder %s178, %s179
      %p190 = scmp.eq.s32.totalorder %s18, 0
      %p191 = por %p189, %p190
      %p192 = scmp.ne.s32.totalorder %s178, %s179
      %p193 = scmp.eq.s32.totalorder %s19, 3
      %p194 = por %p192, %p193
      %p196 = scmp.ne.s32.totalorder %s179, %s195
      %p197 = scmp.eq.s32.totalorder %s19, 0
      %p198 = por %p196, %p197
      %p199 = scmp.le.s32.totalorder 1, %s13
      %p200 = scmp.lt.s32.totalorder %s13, 5
      %p201 = pnand %p199, %p200
      %p202 = pneg %p201
      // Predicated region
      $region9: #{tpu_custom_call.1} parent=5 // pred_check
        _
      $region10: #{tpu_custom_call.1} parent=5 // pred_check_branch
        %204 = sbr.rel (%p201) target = $region12
      $region11: #{tpu_custom_call.1} parent=5 // pred_region
        %s205 = ssub.s32 %s13, 1
        // Predicated region
        $region13: #{tpu_custom_call.1} parent=11 // pred_check
          %p206 = pneg %p60
        $region14: #{tpu_custom_call.1} parent=11 // pred_check_branch
          %208 = sbr.rel (%p206) target = $region16
        $region15: #{tpu_custom_call.1} parent=11 // pred_region
          _
        $region16: #{tpu_custom_call.1} parent=11 // pred_fallthru
          _
        // Predicated region
        $region17: #{tpu_custom_call.1} parent=11 // pred_check
          %p209 = pneg %p81
        $region18: #{tpu_custom_call.1} parent=11 // pred_check_branch
          %211 = sbr.rel (%p209) target = $region20
        $region19: #{tpu_custom_call.1} parent=11 // pred_region
          _
        $region20: #{tpu_custom_call.1} parent=11 // pred_fallthru
          _
        // Predicated region
        $region21: #{tpu_custom_call.1} parent=11 // pred_check
          %p212 = pneg %p102
        $region22: #{tpu_custom_call.1} parent=11 // pred_check_branch
          %214 = sbr.rel (%p212) target = $region24
        $region23: #{tpu_custom_call.1} parent=11 // pred_region
          _
        $region24: #{tpu_custom_call.1} parent=11 // pred_fallthru
          _
        // Predicated region
        $region25: #{tpu_custom_call.1} parent=11 // pred_check
          %p215 = pneg %p123
        $region26: #{tpu_custom_call.1} parent=11 // pred_check_branch
          %217 = sbr.rel (%p215) target = $region28
        $region27: #{tpu_custom_call.1} parent=11 // pred_region
          _
        $region28: #{tpu_custom_call.1} parent=11 // pred_fallthru
          _
        // Predicated region
        $region29: #{tpu_custom_call.1} parent=11 // pred_check
          %p218 = pneg %p144
        $region30: #{tpu_custom_call.1} parent=11 // pred_check_branch
          %220 = sbr.rel (%p218) target = $region32
        $region31: #{tpu_custom_call.1} parent=11 // pred_region
          _
        $region32: #{tpu_custom_call.1} parent=11 // pred_fallthru
          _
        // Predicated region
        $region33: #{tpu_custom_call.1} parent=11 // pred_check
          %p221 = pneg %p165
        $region34: #{tpu_custom_call.1} parent=11 // pred_check_branch
          %223 = sbr.rel (%p221) target = $region36
        $region35: #{tpu_custom_call.1} parent=11 // pred_region
          _
        $region36: #{tpu_custom_call.1} parent=11 // pred_fallthru
          _
      $region12: #{tpu_custom_call.1} parent=5 // pred_fallthru
        _
      %p224 = scmp.lt.s32.totalorder %s13, 4
      // Predicated region
      $region37: #{tpu_custom_call.1} parent=5 // pred_check
        %p225 = pneg %p224
      $region38: #{tpu_custom_call.1} parent=5 // pred_check_branch
        %227 = sbr.rel (%p225) target = $region40
      $region39: #{tpu_custom_call.1} parent=5 // pred_region
        // Predicated region
        $region41: #{tpu_custom_call.1} parent=39 // pred_check
          %p228 = pneg %p33
        $region42: #{tpu_custom_call.1} parent=39 // pred_check_branch
          %230 = sbr.rel (%p228) target = $region44
        $region43: #{tpu_custom_call.1} parent=39 // pred_region
          %s231 = smul.u32 2, %s13
          %s232 = ssub.s32 7, %s231
          %p233 = scmp.lt.s32.totalorder %s232, 2
          %s234 = scalar_select %p233, %s232, 2
          %s235 = smul.u32 8, %s234
          %p236 = scmp.lt.s32.totalorder %s231, 6
          %s237 = scalar_select %p236, %s231, 6
          %s238 = smul.addr %s237, 8
          %s239 = scalar_lea.vmem %s0, %s238
          %s240 = smul.u32 2, %s13
          %s241 = ssub.s32 7, %s240
          %p242 = scmp.lt.s32.totalorder %s241, 2
          %s243 = scalar_select %p242, %s241, 2
          %s244 = smul.u32 8, %s243
        $region44: #{tpu_custom_call.1} parent=39 // pred_fallthru
          _
      $region40: #{tpu_custom_call.1} parent=5 // pred_fallthru
        _
      %p245 = scmp.le.s32.totalorder 1, %s13
      %p246 = scmp.lt.s32.totalorder %s13, 5
      %p247 = pnand %p245, %p246
      %p248 = pneg %p247
      // Predicated region
      $region45: #{tpu_custom_call.1} parent=5 // pred_check
        _
      $region46: #{tpu_custom_call.1} parent=5 // pred_check_branch
        %250 = sbr.rel (%p247) target = $region48
      $region47: #{tpu_custom_call.1} parent=5 // pred_region
        %s251 = ssub.s32 %s13, 1
        %s252 = smul.u32 2, %s18
        %s253 = ssub.s32 7, %s252
        %p254 = scmp.lt.s32.totalorder %s253, 2
        %s255 = scalar_select %p254, %s253, 2
        %s256 = smul.u32 8, %s255
        %p257 = scmp.lt.s32.totalorder %s252, 6
        %s258 = scalar_select %p257, %s252, 6
        %s259 = smul.addr %s258, 8
        %s260 = scalar_lea.vmem %s0, %s259
        %p261 = pneg %p39
        %p262 = pneg %p36
        %p263 = pneg %p60
        %p264 = pneg %p57
        %p265 = pneg %p81
        %p266 = pneg %p78
        %p267 = pneg %p102
        %p268 = pneg %p99
        %p269 = pneg %p123
        %p270 = pneg %p120
        %p271 = pneg %p144
        %p272 = pneg %p141
        %p273 = pneg %p165
        %p274 = pneg %p162
        %p275 = pneg %p191
        %p276 = pneg %p188
        %s277 = sand.u32 %s178, 1
        %s278 = sand.u32 %s178, 1
        %s279 = smul.addr %s278, 16
        %s280 = scalar_lea.vmem [#allocation2], %s279
        %s281 = smul.u32 2, %s18
        %s282 = ssub.s32 7, %s281
        %p283 = scmp.lt.s32.totalorder %s282, 2
        %s284 = scalar_select %p283, %s282, 2
        %s285 = smul.u32 8, %s284
        %p286 = scmp.lt.s32.totalorder %s281, 6
        %s287 = scalar_select %p286, %s281, 6
        %s288 = smul.addr %s287, 8
        %s289 = scalar_lea.vmem %s0, %s288
        %s290 = smul.u32 2, %s18
        %s291 = ssub.s32 7, %s290
        %p292 = scmp.lt.s32.totalorder %s291, 2
        %s293 = scalar_select %p292, %s291, 2
        %s294 = smul.u32 8, %s293
        %s295 = smul.u32 2, %s18
        %s296 = ssub.s32 7, %s295
        %p297 = scmp.lt.s32.totalorder %s296, 2
        %s298 = scalar_select %p297, %s296, 2
        %s299 = smul.u32 8, %s298
        %v301 = vld [vmem:[%s289] sm:$0xff]
        %v302 = vld [vmem:[%s289 + $0x8] sm:$0xff]
        %v303 = vpack.c.bf16 %v302, %v301
        %v304 = vld [vmem:[%s1] sm:$0xf]
        %v305 = vld [vmem:[%s1 + $0x4] sm:$0xf]
        %v306 = vld [vmem:[%s1 + $0x8] sm:$0xf]
        %v307 = vld [vmem:[%s1 + $0xc] sm:$0xf]
        %v312 = vunpack.c.l.b16 %v304
        %v313 = vunpack.c.l.b16 %v305
        %v314 = vunpack.c.l.b16 %v306
        %v315 = vunpack.c.l.b16 %v307
        %v316 = vpack.c.b16 %v313, %v312
        %v317 = vpack.c.b16 %v315, %v314
        %vm320 = vcmask 261120
        %v322 = vsel %vm320, %v303, 0
        %324 = vmatpush.bf16.msra.mxu0 0
        %325 = vmatpush.bf16.msra.mxu0 0
        %326 = vmatpush.bf16.msra.mxu0 0
        %327 = vmatpush.bf16.msra.mxu0 0
        %328 = vmatpush.bf16.msra.mxu0 0
        %329 = vmatpush.bf16.msra.mxu0 0
        %330 = vmatpush.bf16.msra.mxu0 %v317
        %331 = vmatpush.bf16.msra.mxu0 %v316
        %332 = vmatmul.bf16.gmra.mxu0 %v322
        %v333 = vpop.f32.mrf.mxu0
        %v334 = vadd.f32 0.0, %v333
        %v335 = vpop.f32.mrf.mxu0
        %v336 = vadd.f32 0.0, %v335
        %337 = vdwg.mxu0
        %v338 = vpack.c.bf16 %v334, %v334
        %v339 = vpack.c.bf16 %v336, %v336
        %v340 = vld [vmem:[%s2] sm:$0x1]
        %v342 = vpack.i.b16 %v340, %v340
        %v344 = vperm.slane %v342, 0
        %v345 = vunpack.c.l.bf16 %v338
        %v346 = vunpack.c.l.bf16 %v339
        %v347 = vunpack.c.l.bf16 %v344
        %v348 = vadd.f32 %v345, %v347
        %v349 = vadd.f32 %v346, %v347
        %v350 = vpack.c.bf16 %v348, %v348
        %v351 = vpack.c.bf16 %v349, %v349
        %v352 = vunpack.c.l.bf16 %v350
        %v353 = vunpack.c.l.bf16 %v351
        %v354 = vmax.f32 %v352, 0.0
        %v355 = vmax.f32 %v353, 0.0
        %v356 = vpack.c.bf16 %v355, %v354
        %v357 = vld [vmem:[%s3] sm:$0xf]
        %v358 = vld [vmem:[%s3 + $0x4] sm:$0xf]
        %v359 = vld [vmem:[%s3 + $0x8] sm:$0xf]
        %v360 = vld [vmem:[%s3 + $0xc] sm:$0xf]
        %v361 = vld [vmem:[%s3 + $0x10] sm:$0xf]
        %v362 = vld [vmem:[%s3 + $0x14] sm:$0xf]
        %v363 = vld [vmem:[%s3 + $0x18] sm:$0xf]
        %v364 = vld [vmem:[%s3 + $0x1c] sm:$0xf]
        %v373 = vunpack.c.l.b16 %v357
        %v374 = vunpack.c.l.b16 %v358
        %v375 = vunpack.c.l.b16 %v359
        %v376 = vunpack.c.l.b16 %v360
        %v377 = vunpack.c.l.b16 %v361
        %v378 = vunpack.c.l.b16 %v362
        %v379 = vunpack.c.l.b16 %v363
        %v380 = vunpack.c.l.b16 %v364
        %v381 = vpack.c.b16 %v374, %v373
        %v382 = vpack.c.b16 %v376, %v375
        %v383 = vpack.c.b16 %v378, %v377
        %v384 = vpack.c.b16 %v380, %v379
        %vm389 = vcmask 523264
        %v391 = vsel %vm389, %v356, 0
        %393 = vmatpush.bf16.msra.mxu0 0
        %394 = vmatpush.bf16.msra.mxu0 0
        %395 = vmatpush.bf16.msra.mxu0 0
        %396 = vmatpush.bf16.msra.mxu0 0
        %397 = vmatpush.bf16.msra.mxu0 %v384
        %398 = vmatpush.bf16.msra.mxu0 %v383
        %399 = vmatpush.bf16.msra.mxu0 %v382
        %400 = vmatpush.bf16.msra.mxu0 %v381
        %401 = vmatmul.bf16.gmra.mxu0 %v391
        %v402 = vpop.f32.mrf.mxu0
        %v403 = vadd.f32 0.0, %v402
        %v404 = vpop.f32.mrf.mxu0
        %v405 = vadd.f32 0.0, %v404
        %406 = vdwg.mxu0
        %v407 = vpack.c.bf16 %v403, %v403
        %v408 = vpack.c.bf16 %v405, %v405
        %v409 = vld [vmem:[%s4] sm:$0x1]
        %v411 = vpack.i.b16 %v409, %v409
        %v413 = vperm.slane %v411, 0
        %v414 = vunpack.c.l.bf16 %v407
        %v415 = vunpack.c.l.bf16 %v408
        %v416 = vunpack.c.l.bf16 %v413
        %v417 = vadd.f32 %v414, %v416
        %v418 = vadd.f32 %v415, %v416
        %v419 = vpack.c.bf16 %v417, %v417
        %v420 = vpack.c.bf16 %v418, %v418
        %v421 = vunpack.c.l.bf16 %v419
        %v422 = vunpack.c.l.bf16 %v420
        %v423 = vmax.f32 %v421, 0.0
        %v424 = vmax.f32 %v422, 0.0
        %v425 = vpack.c.bf16 %v424, %v423
        %v426 = vld [vmem:[%s5] sm:$0xf]
        %v427 = vld [vmem:[%s5 + $0x4] sm:$0xf]
        %v428 = vld [vmem:[%s6] sm:$0x1]
        %v430 = vperm.slane %v428, 0
        %v434 = vunpack.c.l.b16 %v426
        %v435 = vunpack.c.l.b16 %v427
        %v436 = vpack.c.b16 %v435, %v434
        %vm438 = vcmask 130048
        %v440 = vsel %vm438, %v425, 0
        %442 = vmatpush.bf16.msra.mxu0 0
        %443 = vmatpush.bf16.msra.mxu0 0
        %444 = vmatpush.bf16.msra.mxu0 0
        %445 = vmatpush.bf16.msra.mxu0 0
        %446 = vmatpush.bf16.msra.mxu0 0
        %447 = vmatpush.bf16.msra.mxu0 0
        %448 = vmatpush.bf16.msra.mxu0 0
        %449 = vmatpush.bf16.msra.mxu0 %v436
        %450 = vmatmul.bf16.gmra.mxu0 %v440
        %v451 = vpop.f32.mrf.mxu0
        %v452 = vadd.f32 %v430, %v451
        %v453 = vpop.f32.mrf.mxu0
        %v454 = vadd.f32 %v430, %v453
        %455 = vdwg.mxu0
        %456 = vst.msk [vmem:[%s280] sm:$0xff] %vm438, %v452
        %457 = vst.msk [vmem:[%s280 + $0x8] sm:$0xff] %vm438, %v454
        %s458 = sand.u32 %s178, 1
        %s459 = sand.u32 %s178, 1
        %s460 = smul.addr %s459, 16
        %s461 = scalar_lea.vmem [#allocation2], %s460
        // Predicated region
        $region49: #{tpu_custom_call.1} parent=47 // pred_check
          %p462 = pneg %p188
        $region50: #{tpu_custom_call.1} parent=47 // pred_check_branch
          %464 = sbr.rel (%p462) target = $region52
        $region51: #{tpu_custom_call.1} parent=47 // pred_region
          %s465 = smul.u32 2, %s18
          %s466 = ssub.s32 7, %s465
          %p467 = scmp.lt.s32.totalorder %s466, 2
          %s468 = scalar_select %p467, %s466, 2
          %s469 = smul.u32 8, %s468
          %p470 = scmp.ne.s32.totalorder 0, %s469
          %s471 = smul.addr %s465, 8
          %s472 = scalar_lea.vmem %s7, %s471
          // Predicated region
          $region53: #{tpu_custom_call.1} parent=51 // pred_check
            %p473 = pneg %p470
          $region54: #{tpu_custom_call.1} parent=51 // pred_check_branch
            %475 = sbr.rel (%p473) target = $region56
          $region55: #{tpu_custom_call.1} parent=51 // pred_region
            // Predicated region
            $region57: #{tpu_custom_call.1} parent=55 // pred_check
              _
            $region58: #{tpu_custom_call.1} parent=55 // pred_check_branch
              %477 = sbr.rel (0) target = $region60
            $region59: #{tpu_custom_call.1} parent=55 // pred_region
              // Predicated region
              $region79: #{tpu_custom_call.1} parent=59 // pred_check
                _
              $region80: #{tpu_custom_call.1} parent=59 // pred_check_branch
                %529 = sbr.rel (0) target = $region82
              $region81: #{tpu_custom_call.1} parent=59 // pred_region
                %s530 = sshrl.u32 %s468, 1
                // While loop
                $region83: #{tpu_custom_call.1} parent=81 // loop_pre_header
                  _
                $region84: #{tpu_custom_call.1} parent=81 // loop_header
                  %s532 = sphi 0, %s534
                  %p533 = scmp.ge.s32.totalorder %s532, %s530
                  %s537 = sphi 0, %s546
                  %s538 = sphi %s461, %s549
                  %s539 = sphi %s472, %s550
                $region85: #{tpu_custom_call.1} parent=81 // loop_header_branch
                  %536 = sbr.rel (%p533) target = $region89
                $region86: #{tpu_custom_call.1} parent=81 // loop_body
                  %v540 = vld [vmem:[%s538] sm:$0xff]
                  %541 = vst [vmem:[%s539] sm:$0xff] %v540
                  %v542 = vld [vmem:[%s538 + $0x8] sm:$0xff]
                  %543 = vst [vmem:[%s539 + $0x8] sm:$0xff] %v542
                  %s544 = sadd.s32 1, %s537
                  %p545 = scmp.ge.s32.totalorder %s544, %s530
                  %s546 = scalar_select %p545, 0, %s544
                  %s547 = smul.u32 %s546, 16
                  %s548 = smul.u32 %s546, 16
                  %s549 = scalar_lea.vmem %s461, %s547 [#allocation2]
                  %s550 = scalar_lea.vmem %s472, %s548
                $region87: #{tpu_custom_call.1} parent=81 // loop_footer
                  %s534 = sadd.s32 %s532, 1
                $region88: #{tpu_custom_call.1} parent=81 // loop_footer_branch
                  %531 = sbr.rel target = $region84
                $region89: #{tpu_custom_call.1} parent=81 // loop_exit
                  _
                %s551 = sshrl.u32 %s468, 1
                %s552 = sand.u32 %s468, 1
                %s553 = smul.u32 %s551, 2
                %s554 = smul.u32 8, %s553
                %s555 = scalar_lea.vmem %s461, %s554 [#allocation2]
                %s556 = smul.u32 8, %s553
                %s557 = scalar_lea.vmem %s472, %s556
                // While loop
                $region90: #{tpu_custom_call.1} parent=81 // loop_pre_header
                  _
                $region91: #{tpu_custom_call.1} parent=81 // loop_header
                  %s559 = sphi 0, %s561
                  %p560 = scmp.ge.s32.totalorder %s559, %s552
                  %s564 = sphi 0, %s571
                  %s565 = sphi %s555, %s574
                  %s566 = sphi %s557, %s575
                $region92: #{tpu_custom_call.1} parent=81 // loop_header_branch
                  %563 = sbr.rel (%p560) target = $region96
                $region93: #{tpu_custom_call.1} parent=81 // loop_body
                  %v567 = vld [vmem:[%s565] sm:$0xff]
                  %568 = vst [vmem:[%s566] sm:$0xff] %v567
                  %s569 = sadd.s32 1, %s564
                  %p570 = scmp.ge.s32.totalorder %s569, %s552
                  %s571 = scalar_select %p570, 0, %s569
                  %s572 = smul.u32 %s571, 8
                  %s573 = smul.u32 %s571, 8
                  %s574 = scalar_lea.vmem %s555, %s572 [#allocation2]
                  %s575 = scalar_lea.vmem %s557, %s573
                $region94: #{tpu_custom_call.1} parent=81 // loop_footer
                  %s561 = sadd.s32 %s559, 1
                $region95: #{tpu_custom_call.1} parent=81 // loop_footer_branch
                  %558 = sbr.rel target = $region91
                $region96: #{tpu_custom_call.1} parent=81 // loop_exit
                  _
              $region82: #{tpu_custom_call.1} parent=59 // pred_fallthru
                _
              // Predicated region
              $region97: #{tpu_custom_call.1} parent=59 // pred_check
                _
              $region98: #{tpu_custom_call.1} parent=59 // pred_check_branch
                %577 = sbr.rel target = $region100
              $region99: #{tpu_custom_call.1} parent=59 // pred_region
                _
              $region100: #{tpu_custom_call.1} parent=59 // pred_fallthru
                _
            $region60: #{tpu_custom_call.1} parent=55 // pred_fallthru
              _
            // Predicated region
            $region61: #{tpu_custom_call.1} parent=55 // pred_check
              _
            $region62: #{tpu_custom_call.1} parent=55 // pred_check_branch
              %479 = sbr.rel target = $region64
            $region63: #{tpu_custom_call.1} parent=55 // pred_region
              %s481 = ssub.s32 256, 1
              %s482 = sshrl.u32 %s468, 1
              // While loop
              $region65: #{tpu_custom_call.1} parent=63 // loop_pre_header
                _
              $region66: #{tpu_custom_call.1} parent=63 // loop_header
                %s484 = sphi 0, %s486
                %p485 = scmp.ge.s32.totalorder %s484, %s482
                %s489 = sphi 0, %s498
                %s490 = sphi %s461, %s501
                %s491 = sphi %s472, %s502
              $region67: #{tpu_custom_call.1} parent=63 // loop_header_branch
                %488 = sbr.rel (%p485) target = $region71
              $region68: #{tpu_custom_call.1} parent=63 // loop_body
                %v492 = vld [vmem:[%s490] sm:%s481]
                %493 = vst [vmem:[%s491] sm:%s481] %v492
                %v494 = vld [vmem:[%s490 + $0x8] sm:%s481]
                %495 = vst [vmem:[%s491 + $0x8] sm:%s481] %v494
                %s496 = sadd.s32 1, %s489
                %p497 = scmp.ge.s32.totalorder %s496, %s482
                %s498 = scalar_select %p497, 0, %s496
                %s499 = smul.u32 %s498, 16
                %s500 = smul.u32 %s498, 16
                %s501 = scalar_lea.vmem %s461, %s499 [#allocation2]
                %s502 = scalar_lea.vmem %s472, %s500
              $region69: #{tpu_custom_call.1} parent=63 // loop_footer
                %s486 = sadd.s32 %s484, 1
              $region70: #{tpu_custom_call.1} parent=63 // loop_footer_branch
                %483 = sbr.rel target = $region66
              $region71: #{tpu_custom_call.1} parent=63 // loop_exit
                _
              %s503 = sshrl.u32 %s468, 1
              %s504 = sand.u32 %s468, 1
              %s505 = smul.u32 %s503, 2
              %s506 = smul.u32 8, %s505
              %s507 = scalar_lea.vmem %s461, %s506 [#allocation2]
              %s508 = smul.u32 8, %s505
              %s509 = scalar_lea.vmem %s472, %s508
              // While loop
              $region72: #{tpu_custom_call.1} parent=63 // loop_pre_header
                _
              $region73: #{tpu_custom_call.1} parent=63 // loop_header
                %s511 = sphi 0, %s513
                %p512 = scmp.ge.s32.totalorder %s511, %s504
                %s516 = sphi 0, %s523
                %s517 = sphi %s507, %s526
                %s518 = sphi %s509, %s527
              $region74: #{tpu_custom_call.1} parent=63 // loop_header_branch
                %515 = sbr.rel (%p512) target = $region78
              $region75: #{tpu_custom_call.1} parent=63 // loop_body
                %v519 = vld [vmem:[%s517] sm:%s481]
                %520 = vst [vmem:[%s518] sm:%s481] %v519
                %s521 = sadd.s32 1, %s516
                %p522 = scmp.ge.s32.totalorder %s521, %s504
                %s523 = scalar_select %p522, 0, %s521
                %s524 = smul.u32 %s523, 8
                %s525 = smul.u32 %s523, 8
                %s526 = scalar_lea.vmem %s507, %s524 [#allocation2]
                %s527 = scalar_lea.vmem %s509, %s525
              $region76: #{tpu_custom_call.1} parent=63 // loop_footer
                %s513 = sadd.s32 %s511, 1
              $region77: #{tpu_custom_call.1} parent=63 // loop_footer_branch
                %510 = sbr.rel target = $region73
              $region78: #{tpu_custom_call.1} parent=63 // loop_exit
                _
            $region64: #{tpu_custom_call.1} parent=55 // pred_fallthru
              _
          $region56: #{tpu_custom_call.1} parent=51 // pred_fallthru
            _
          %578 = vnop
        $region52: #{tpu_custom_call.1} parent=47 // pred_fallthru
          _
      $region48: #{tpu_custom_call.1} parent=5 // pred_fallthru
        _
      %p579 = scmp.le.s32.totalorder 2, %s13
      // Predicated region
      $region101: #{tpu_custom_call.1} parent=5 // pred_check
        %p580 = pneg %p579
      $region102: #{tpu_custom_call.1} parent=5 // pred_check_branch
        %582 = sbr.rel (%p580) target = $region104
      $region103: #{tpu_custom_call.1} parent=5 // pred_region
        %s583 = ssub.s32 %s13, 2
        // Predicated region
        $region105: #{tpu_custom_call.1} parent=103 // pred_check
          %p584 = pneg %p194
        $region106: #{tpu_custom_call.1} parent=103 // pred_check_branch
          %586 = sbr.rel (%p584) target = $region108
        $region107: #{tpu_custom_call.1} parent=103 // pred_region
          %s587 = sand.u32 %s179, 1
          %s588 = sand.u32 %s179, 1
          %s589 = smul.addr %s588, 16
          %s590 = scalar_lea.vmem [#allocation2], %s589
        $region108: #{tpu_custom_call.1} parent=103 // pred_fallthru
          _
      $region104: #{tpu_custom_call.1} parent=5 // pred_fallthru
        _
    $region6: #{tpu_custom_call.1} parent=1 // loop_footer
      %s17 = sadd.s32 1, %s13
    $region7: #{tpu_custom_call.1} parent=1 // loop_footer_branch
      %12 = sbr.rel target = $region3
    $region8: #{tpu_custom_call.1} parent=1 // loop_exit
      _

</llo_original>
